<compile_context>
chip_gen: v5e
topology: v5e:2x2
jax: 0.10.0
libtpu: 0.0.40
codegen_flags: <defaults>
</compile_context>

<pallas_src>
import jax
import jax.numpy as jnp
import numpy as np
from jax.experimental import pallas as pl
from jax.experimental.pallas import tpu as pltpu

KH = KW = 4
STRIDE = 2
PAD = 1
EPS = 1e-5
NEG_SLOPE = 0.1


def _vmem_limit_bytes():
    """~3/4 of physical VMEM, capped at 64 MiB (=> 64 MiB on v5e/v6e, 48 MiB on v7x)."""
    cap = 128 * 1024 * 1024
    try:
        info_cap = int(pltpu.get_tpu_info().vmem_capacity_bytes)
        if info_cap > 0:
            cap = info_cap
    except Exception:
        pass
    return int(min(64 * 1024 * 1024, (cap * 3) // 4))


def _pick_row_tile(rows, target):
    """Largest multiple-of-16 divisor of `rows` that is <= target (else `rows`)."""
    if rows <= target:
        return rows
    t = (min(target, rows) // 16) * 16
    while t >= 16:
        if rows % t == 0:
            return t
        t -= 16
    return rows


def _build_fused_weight(weight, c_in, c_out):
    """ConvTranspose2d weight (C_in, C_out, 4, 4) -> fused (9*C_in, 4*C_out).

    Row index = (a*3 + b)*C_in + ci   for the x_halo window shifted by (a, b),
    col index = (ph*2 + pw)*C_out + co for output phase (oh%2, ow%2) = (ph, pw).
    Taps a phase does not touch are zero.
    """
    w_perm = jnp.transpose(weight, (2, 3, 0, 1))          # (KH, KW, C_in, C_out)
    w_fused = jnp.zeros((3, 3, c_in, 4, c_out), jnp.float32)
    for ph in range(2):
        for pw in range(2):
            for dy in range(2):
                for dx in range(2):
                    a, b = ph + dy, pw + dx
                    kh, kw = 3 - ph - 2 * dy, 3 - pw - 2 * dx
                    w_fused = w_fused.at[a, b, :, ph * 2 + pw, :].set(w_perm[kh, kw])
    return w_fused.reshape(9 * c_in, 4 * c_out).astype(jnp.bfloat16)


def conv_transpose_block(x, skip, weight, gamma, beta, *, row_tile=512):
    """x: (N, C_in, H, W) NCHW; skip: (N, C_skip, 2H, 2W); weight: (C_in, C_out, 4, 4)."""
    n, c_in, h, w = x.shape
    c_out = weight.shape[1]
    c_skip = skip.shape[1]
    oh, ow = STRIDE * h, STRIDE * w
    assert skip.shape == (n, c_skip, oh, ow)

    rows = h * w                      # output pixels per phase per image
    k9 = 9 * c_in                     # fused contraction dim
    nphc = 4 * c_out                  # fused output width (phase-major, channel-minor)
    vmem_limit = _vmem_limit_bytes()

    # ---- glue: NCHW -> NHWC, +1 halo, bf16 (one ~x-sized copy; no im2col slab) ----
    x_nhwc = jnp.transpose(x, (0, 2, 3, 1))
    x_halo = jnp.pad(x_nhwc, ((0, 0), (1, 1), (1, 1), (0, 0))).astype(jnp.bfloat16)
    w_fused = _build_fused_weight(weight.astype(jnp.float32), c_in, c_out)

    # ---- pass 1: per-image fused conv matmul + partial BN stats ----
    def conv_stats_kernel(x_ref, w_ref, conv_ref, stats_ref):
        # x_ref: (1, h+2, w+2, c_in) bf16 ; w_ref: (9*c_in, 4*c_out) bf16
        xb = x_ref[0].astype(jnp.float32)     # gather/relayout done in f32 (robust path)
        wins = [xb[a:a + h, b:b + w, :] for a in range(3) for b in range(3)]
        slab = jnp.concatenate(wins, axis=-1)                 # (h, w, 9*c_in)
        slab = slab.reshape(rows, k9).astype(jnp.bfloat16)    # leading-dim collapse only
        acc = jnp.dot(slab, w_ref[...],
                      preferred_element_type=jnp.float32)     # (rows, 4*c_out) f32
        conv_ref[0] = acc.astype(jnp.bfloat16)                # bf16 intermediate
        # Partial BN statistics from the f32 accumulator (sum / sum-of-squares).
        # NOTE: E[x^2]-E[x]^2 in f32 can cancel for very large/shifted activations.
        stats_ref[0, 0:1, :] = jnp.sum(acc, axis=0, keepdims=True)
        stats_ref[0, 1:2, :] = jnp.sum(acc * acc, axis=0, keepdims=True)

    flops1 = 2 * n * rows * k9 * nphc
    bytes1 = (x_halo.size * 2 + n * w_fused.size * 2
              + n * rows * nphc * 2 + n * 2 * nphc * 4)
    conv, stats = pl.pallas_call(
        conv_stats_kernel,
        grid=(n,),
        in_specs=[
            pl.BlockSpec((1, h + 2, w + 2, c_in), lambda i: (i, 0, 0, 0)),
            pl.BlockSpec((k9, nphc), lambda i: (0, 0)),
        ],
        out_specs=(
            pl.BlockSpec((1, rows, nphc), lambda i: (i, 0, 0)),
            pl.BlockSpec((1, 2, nphc), lambda i: (i, 0, 0)),
        ),
        out_shape=(
            jax.ShapeDtypeStruct((n, rows, nphc), jnp.bfloat16),
            jax.ShapeDtypeStruct((n, 2, nphc), jnp.float32),
        ),
        compiler_params=pltpu.CompilerParams(
            dimension_semantics=("parallel",),
            vmem_limit_bytes=vmem_limit),
        cost_estimate=pl.CostEstimate(
            flops=flops1, transcendentals=0, bytes_accessed=bytes1),
    )(x_halo, w_fused)
    # TODO(synk): for very large H*W*C_in, add a halo-tiled h grid (manual DMA) so the
    # per-image input block stays within VMEM; whole-image blocks are fine for typical
    # decoder shapes and read x exactly once.

    # ---- fold BN affine (training-mode batch statistics) ----
    totals = jnp.sum(stats.reshape(n, 2, 4, c_out), axis=(0, 2))   # (2, c_out) f32
    count = jnp.float32(n * oh * ow)
    mean = totals[0] / count
    var = jnp.maximum(totals[1] / count - mean * mean, 0.0)
    inv = jax.lax.rsqrt(var + EPS)
    scale_c = gamma.astype(jnp.float32) * inv
    shift_c = beta.astype(jnp.float32) - mean * scale_c
    scale = jnp.tile(scale_c, 4).reshape(1, nphc)      # phase-major column layout
    shift = jnp.tile(shift_c, 4).reshape(1, nphc)
    # TODO(synk): BatchNorm2d running_mean/running_var buffers are not updated/returned.

    # ---- pass 2: normalize + LeakyReLU, row-tiled, flattened 1-D parallel grid ----
    t2 = _pick_row_tile(rows, row_tile)
    tiles_per_img = rows // t2

    def bn_lrelu_kernel(conv_ref, scale_ref, shift_ref, out_ref):
        y = conv_ref[0].astype(jnp.float32) * scale_ref[...] + shift_ref[...]
        out_ref[0] = jnp.where(y >= 0, y, NEG_SLOPE * y)

    row_map = lambda g: (g // tiles_per_img, g % tiles_per_img, 0)
    y2 = pl.pallas_call(
        bn_lrelu_kernel,
        grid=(n * tiles_per_img,),
        in_specs=[
            pl.BlockSpec((1, t2, nphc), row_map),
            pl.BlockSpec((1, nphc), lambda g: (0, 0)),
            pl.BlockSpec((1, nphc), lambda g: (0, 0)),
        ],
        out_specs=pl.BlockSpec((1, t2, nphc), row_map),
        out_shape=jax.ShapeDtypeStruct((n, rows, nphc), jnp.float32),
        compiler_params=pltpu.CompilerParams(
            dimension_semantics=("parallel",),
            vmem_limit_bytes=vmem_limit),
        cost_estimate=pl.CostEstimate(
            flops=4 * n * rows * nphc, transcendentals=0,
            bytes_accessed=n * rows * nphc * (2 + 4)),
    )(conv, scale, shift)

    # ---- glue: ONE composed transpose (phase interleave + NHWC->NCHW), concat skip ----
    y = y2.reshape(n, h, w, 2, 2, c_out)               # (n, qy, qx, ph, pw, c)
    y = jnp.transpose(y, (0, 5, 1, 3, 2, 4))           # (n, c, qy, ph, qx, pw)
    y = y.reshape(n, c_out, oh, ow)                    # oh = 2*qy+ph, ow = 2*qx+pw
    return jnp.concatenate([y, skip.astype(y.dtype)], axis=1)


def _reference(x, skip, weight, gamma, beta):
    """Pure-JAX f32 reference (XLA conv) for the same forward semantics."""
    c_out = weight.shape[1]
    w_conv = jnp.transpose(weight, (1, 0, 2, 3))[:, :, ::-1, ::-1]
    conv = jax.lax.conv_general_dilated(
        x, w_conv, window_strides=(1, 1),
        padding=((KH - 1 - PAD,) * 2, (KW - 1 - PAD,) * 2),
        lhs_dilation=(STRIDE, STRIDE),
        dimension_numbers=('NCHW', 'OIHW', 'NCHW'))
    mean = jnp.mean(conv, axis=(0, 2, 3), keepdims=True)
    var = jnp.mean((conv - mean) ** 2, axis=(0, 2, 3), keepdims=True)
    y = (conv - mean) * jax.lax.rsqrt(var + EPS)
    y = y * gamma.reshape(1, c_out, 1, 1) + beta.reshape(1, c_out, 1, 1)
    y = jnp.where(y >= 0, y, NEG_SLOPE * y)
    return jnp.concatenate([y, skip], axis=1)


if __name__ == "__main__":
    key = jax.random.PRNGKey(0)
    k1, k2, k3 = jax.random.split(key, 3)

    N, C_IN, C_OUT, H, W = 2, 4, 4, 16, 16
    x = jax.random.normal(k1, (N, C_IN, H, W), jnp.float32)
    skip = jax.random.normal(k2, (N, C_OUT, STRIDE * H, STRIDE * W), jnp.float32)
    # ConvTranspose2d(c_in, c_out, 4, 2, 1, bias=False) weight: (C_in, C_out, 4, 4)
    weight = jax.random.normal(k3, (C_IN, C_OUT, KH, KW), jnp.float32) * 0.1
    # BatchNorm2d default affine params
    gamma = jnp.ones((C_OUT,), jnp.float32)
    beta = jnp.zeros((C_OUT,), jnp.float32)

    out = conv_transpose_block(x, skip, weight, gamma, beta)
    out = jax.block_until_ready(out)

    assert out.shape == (N, C_OUT + C_OUT, STRIDE * H, STRIDE * W)
    ref = _reference(x, skip, weight, gamma, beta)
    # bf16 MXU inputs and bf16 conv intermediate (f32 accumulation) -> loose tolerance.
    np.testing.assert_allclose(np.asarray(out), np.asarray(ref), rtol=2e-2, atol=2e-2)
    print("KERNEL_OK")
</pallas_src>

<mosaic_0001>
module attributes {stable_mosaic.version = 11 : i64} {
  func.func @conv_stats_kernel(%arg0: i32, %arg1: memref<1x18x18x4xbf16, #tpu.memory_space<vmem>>, %arg2: memref<36x16xbf16, #tpu.memory_space<vmem>>, %arg3: memref<1x256x16xbf16, #tpu.memory_space<vmem>>, %arg4: memref<1x2x16xf32, #tpu.memory_space<vmem>>) attributes {dimension_semantics = [#tpu.dimension_semantics<parallel>], iteration_bounds = array<i64: 2>, scalar_prefetch = 0 : i64, scratch_operands = 0 : i64, tpu.core_type = #tpu.core_type<tc>, window_params = [{transform_indices = @transform_0, window_bounds = array<i64: 1, 18, 18, 4>}, {pipeline_mode = #tpu.pipeline_mode<synchronous>, transform_indices = @transform_1, window_bounds = array<i64: 36, 16>}, {transform_indices = @transform_2, window_bounds = array<i64: 1, 256, 16>}, {transform_indices = @transform_3, window_bounds = array<i64: 1, 2, 16>}]} {
    %c0 = arith.constant 0 : index
    %c0_0 = arith.constant 0 : index
    %c0_1 = arith.constant 0 : index
    %c0_2 = arith.constant 0 : index
    %0 = vector.load %arg1[%c0, %c0_0, %c0_1, %c0_2] : memref<1x18x18x4xbf16, #tpu.memory_space<vmem>>, vector<1x18x18x4xbf16>
    %1 = vector.shape_cast %0 : vector<1x18x18x4xbf16> to vector<18x18x4xbf16>
    %2 = arith.extf %1 : vector<18x18x4xbf16> to vector<18x18x4xf32>
    %3 = vector.extract_strided_slice %2 {offsets = [0, 0, 0], sizes = [16, 16, 4], strides = [1, 1, 1]} : vector<18x18x4xf32> to vector<16x16x4xf32>
    %4 = vector.extract_strided_slice %2 {offsets = [0, 1, 0], sizes = [16, 16, 4], strides = [1, 1, 1]} : vector<18x18x4xf32> to vector<16x16x4xf32>
    %5 = vector.extract_strided_slice %2 {offsets = [0, 2, 0], sizes = [16, 16, 4], strides = [1, 1, 1]} : vector<18x18x4xf32> to vector<16x16x4xf32>
    %6 = vector.extract_strided_slice %2 {offsets = [1, 0, 0], sizes = [16, 16, 4], strides = [1, 1, 1]} : vector<18x18x4xf32> to vector<16x16x4xf32>
    %7 = vector.extract_strided_slice %2 {offsets = [1, 1, 0], sizes = [16, 16, 4], strides = [1, 1, 1]} : vector<18x18x4xf32> to vector<16x16x4xf32>
    %8 = vector.extract_strided_slice %2 {offsets = [1, 2, 0], sizes = [16, 16, 4], strides = [1, 1, 1]} : vector<18x18x4xf32> to vector<16x16x4xf32>
    %9 = vector.extract_strided_slice %2 {offsets = [2, 0, 0], sizes = [16, 16, 4], strides = [1, 1, 1]} : vector<18x18x4xf32> to vector<16x16x4xf32>
    %10 = vector.extract_strided_slice %2 {offsets = [2, 1, 0], sizes = [16, 16, 4], strides = [1, 1, 1]} : vector<18x18x4xf32> to vector<16x16x4xf32>
    %11 = vector.extract_strided_slice %2 {offsets = [2, 2, 0], sizes = [16, 16, 4], strides = [1, 1, 1]} : vector<18x18x4xf32> to vector<16x16x4xf32>
    %12 = tpu.concatenate %3, %4, %5, %6, %7, %8, %9, %10, %11 in 2 : vector<16x16x4xf32>, vector<16x16x4xf32>, vector<16x16x4xf32>, vector<16x16x4xf32>, vector<16x16x4xf32>, vector<16x16x4xf32>, vector<16x16x4xf32>, vector<16x16x4xf32>, vector<16x16x4xf32> -> vector<16x16x36xf32>
    %13 = vector.shape_cast %12 : vector<16x16x36xf32> to vector<256x36xf32>
    %14 = arith.truncf %13 : vector<256x36xf32> to vector<256x36xbf16>
    %c0_3 = arith.constant 0 : index
    %c0_4 = arith.constant 0 : index
    %15 = vector.load %arg2[%c0_3, %c0_4] : memref<36x16xbf16, #tpu.memory_space<vmem>>, vector<36x16xbf16>
    %cst = arith.constant dense<0.000000e+00> : vector<256x16xf32>
    %16 = tpu.matmul %14, %15, %cst {dimension_numbers = #tpu.dot_dimension_numbers<[1], [0], [0], [1], [0, 0, 1, 1], [], []>} : vector<256x36xbf16>, vector<36x16xbf16>, vector<256x16xf32> -> vector<256x16xf32>
    %17 = arith.truncf %16 : vector<256x16xf32> to vector<256x16xbf16>
    %c0_5 = arith.constant 0 : index
    %c0_6 = arith.constant 0 : index
    %c0_7 = arith.constant 0 : index
    %18 = vector.load %arg3[%c0_5, %c0_6, %c0_7] : memref<1x256x16xbf16, #tpu.memory_space<vmem>>, vector<1x256x16xbf16>
    %19 = vector.shape_cast %18 : vector<1x256x16xbf16> to vector<256x16xbf16>
    %20 = vector.shape_cast %17 : vector<256x16xbf16> to vector<1x256x16xbf16>
    tpu.vector_store %arg3[%c0_5, %c0_6, %c0_7], %20 {strides = array<i32>} : memref<1x256x16xbf16, #tpu.memory_space<vmem>>, vector<1x256x16xbf16>,
    %cst_8 = arith.constant dense<0.000000e+00> : vector<16xf32>
    %21 = vector.multi_reduction <add>, %16, %cst_8 [0] : vector<256x16xf32> to vector<16xf32>
    %22 = vector.shape_cast %21 : vector<16xf32> to vector<1x16xf32>
    %c0_9 = arith.constant 0 : index
    %c0_10 = arith.constant 0 : index
    %c0_11 = arith.constant 0 : index
    %23 = vector.load %arg4[%c0_9, %c0_10, %c0_11] : memref<1x2x16xf32, #tpu.memory_space<vmem>>, vector<1x1x16xf32>
    %24 = vector.shape_cast %23 : vector<1x1x16xf32> to vector<1x16xf32>
    %25 = vector.shape_cast %22 : vector<1x16xf32> to vector<1x1x16xf32>
    tpu.vector_store %arg4[%c0_9, %c0_10, %c0_11], %25 {strides = array<i32>} : memref<1x2x16xf32, #tpu.memory_space<vmem>>, vector<1x1x16xf32>,
    %26 = arith.mulf %16, %16 : vector<256x16xf32>
    %cst_12 = arith.constant dense<0.000000e+00> : vector<16xf32>
    %27 = vector.multi_reduction <add>, %26, %cst_12 [0] : vector<256x16xf32> to vector<16xf32>
    %28 = vector.shape_cast %27 : vector<16xf32> to vector<1x16xf32>
    %c0_13 = arith.constant 0 : index
    %c1 = arith.constant 1 : index
    %c0_14 = arith.constant 0 : index
    %29 = vector.load %arg4[%c0_13, %c1, %c0_14] : memref<1x2x16xf32, #tpu.memory_space<vmem>>, vector<1x1x16xf32>
    %30 = vector.shape_cast %29 : vector<1x1x16xf32> to vector<1x16xf32>
    %31 = vector.shape_cast %28 : vector<1x16xf32> to vector<1x1x16xf32>
    tpu.vector_store %arg4[%c0_13, %c1, %c0_14], %31 {strides = array<i32>} : memref<1x2x16xf32, #tpu.memory_space<vmem>>, vector<1x1x16xf32>,
    return
  }
  func.func @transform_0(%arg0: i32) -> (i32, i32, i32, i32) {
    %c0_i32 = arith.constant 0 : i32
    %c0_i32_0 = arith.constant 0 : i32
    %c0_i32_1 = arith.constant 0 : i32
    %c0_i32_2 = arith.constant 0 : i32
    return %arg0, %c0_i32, %c0_i32_0, %c0_i32_1 : i32, i32, i32, i32
  }
  func.func @transform_1(%arg0: i32) -> (i32, i32) {
    %c0_i32 = arith.constant 0 : i32
    %c0_i32_0 = arith.constant 0 : i32
    %c0_i32_1 = arith.constant 0 : i32
    return %c0_i32, %c0_i32_0 : i32, i32
  }
  func.func @transform_2(%arg0: i32) -> (i32, i32, i32) {
    %c0_i32 = arith.constant 0 : i32
    %c0_i32_0 = arith.constant 0 : i32
    %c0_i32_1 = arith.constant 0 : i32
    return %arg0, %c0_i32, %c0_i32_0 : i32, i32, i32
  }
  func.func @transform_3(%arg0: i32) -> (i32, i32, i32) {
    %c0_i32 = arith.constant 0 : i32
    %c0_i32_0 = arith.constant 0 : i32
    %c0_i32_1 = arith.constant 0 : i32
    return %arg0, %c0_i32, %c0_i32_0 : i32, i32, i32
  }
}

</mosaic_0001>

<llo_original>
// kernel: tpu_custom_call.1
$region0: #{tpu_custom_call.1}
  #allocation0 [shape = 'u32[]', space=smem, size = 0x4, offset = 0x4, fixed_abs, tag = 'smem constant byte address 0x4 - core index']
  #allocation1 [shape = 'u32[72,128]{1,0:T(1,128)}', space=vmem, size = 0x9000, scoped, tag = 'internal scratch']
  %s0 = inlined_call_operand.vmem [shape: bf16[2,18,18,4], index: 0, kind: input, shape index: {}]
  %s1 = inlined_call_operand.vmem [shape: bf16[36,16], index: 1, kind: input, shape index: {}]
  %s2 = inlined_call_operand.vmem [shape: bf16[2,256,16], index: 2, kind: output, shape index: {0}]
  %s3 = inlined_call_operand.hbm [shape: f32[2,2,16], index: 3, kind: output, shape index: {1}]
  %4 = xla_tuple %s2, %s3
  %s5 = sld [smem:[#allocation0]]
  $region49: #{tpu_custom_call.1} parent=0
    _
  %s7 = ssub.s32 1, %s5
  %s8 = scalar_select 0, %s7, %s5
  $region1: #{tpu_custom_call.1} parent=0
    #allocation2 [shape = 'u8[2048]{0}', space=vmem, size = 0x800, scoped, tag = 'output window, operand 1']
    #allocation3 [shape = 's32[2]{0}', space=sflag, size = 0x8, scoped, tag = 'scoped memory for tpu_custom_call.1']
    %9 = vsyncpa [#allocation3], 0
    %s10 = scalar_lea.sflag [#allocation3], 1
    %11 = vsyncpa %s10, 0
    loop: start=0, step=1, limit=4
    $region2: #{tpu_custom_call.1} parent=1 // loop_pre_header
      _
    $region3: #{tpu_custom_call.1} parent=1 // loop_header
      %s13 = sphi 0, %s17
      %p14 = scmp.ge.s32.totalorder %s13, 4
      %s23 = sphi 0, %s25
      %s26 = sphi 0, %s23
      %s27 = sphi 0, %s26
      %s43 = sphi 0, %s27
      %s47 = sphi 0, %s47
      %s49 = sphi 0, %s47
      %s50 = sphi 0, %s49
      %s64 = sphi 0, %s50
      %s70 = sphi 0, %s72
      %s73 = sphi 0, %s70
      %s74 = sphi 0, %s73
      %s90 = sphi 0, %s74
      %s96 = sphi 0, %s98
      %s99 = sphi 0, %s96
      %s100 = sphi 0, %s99
      %s116 = sphi 0, %s100
    $region4: #{tpu_custom_call.1} parent=1 // loop_header_branch
      %16 = sbr.rel (%p14) target = $region8
    $region5: #{tpu_custom_call.1} parent=1 // loop_body
      %s18 = ssub.s32 %s13, 1
      %s19 = ssub.s32 %s13, 2
      %s20 = sadd.s32 %s13, 1
      %s21 = ssub.s32 %s13, %s20
      %p22 = scmp.eq.s32.totalorder %s21, 0
      %s24 = sadd.s32 %s23, 1
      %s25 = scalar_select %p22, %s23, %s24
      %p28 = pneg %p22
      %p29 = scmp.eq.s32.totalorder %s13, 1
      %p30 = por %p28, %p29
      %p31 = scmp.ne.s32.totalorder %s23, %s26
      %p32 = scmp.eq.s32.totalorder %s13, 0
      %p33 = por %p31, %p32
      %p34 = scmp.ne.s32.totalorder %s23, %s26
      %p35 = scmp.eq.s32.totalorder %s18, 1
      %p36 = por %p34, %p35
      %p37 = scmp.ne.s32.totalorder %s26, %s27
      %p38 = scmp.eq.s32.totalorder %s18, 0
      %p39 = por %p37, %p38
      %p40 = scmp.ne.s32.totalorder %s26, %s27
      %p41 = scmp.eq.s32.totalorder %s19, 1
      %p42 = por %p40, %p41
      %p44 = scmp.ne.s32.totalorder %s27, %s43
      %p45 = scmp.eq.s32.totalorder %s19, 0
      %p46 = por %p44, %p45
      %s48 = sadd.s32 %s47, 1
      %p51 = scmp.eq.s32.totalorder %s13, 1
      %p52 = scmp.ne.s32.totalorder %s47, %s49
      %p53 = scmp.eq.s32.totalorder %s13, 0
      %p54 = por %p52, %p53
      %p55 = scmp.ne.s32.totalorder %s47, %s49
      %p56 = scmp.eq.s32.totalorder %s18, 1
      %p57 = por %p55, %p56
      %p58 = scmp.ne.s32.totalorder %s49, %s50
      %p59 = scmp.eq.s32.totalorder %s18, 0
      %p60 = por %p58, %p59
      %p61 = scmp.ne.s32.totalorder %s49, %s50
      %p62 = scmp.eq.s32.totalorder %s19, 1
      %p63 = por %p61, %p62
      %p65 = scmp.ne.s32.totalorder %s50, %s64
      %p66 = scmp.eq.s32.totalorder %s19, 0
      %p67 = por %p65, %p66
      %s68 = ssub.s32 %s13, %s20
      %p69 = scmp.eq.s32.totalorder %s68, 0
      %s71 = sadd.s32 %s70, 1
      %s72 = scalar_select %p69, %s70, %s71
      %p75 = pneg %p69
      %p76 = scmp.eq.s32.totalorder %s13, 1
      %p77 = por %p75, %p76
      %p78 = scmp.ne.s32.totalorder %s70, %s73
      %p79 = scmp.eq.s32.totalorder %s13, 0
      %p80 = por %p78, %p79
      %p81 = scmp.ne.s32.totalorder %s70, %s73
      %p82 = scmp.eq.s32.totalorder %s18, 1
      %p83 = por %p81, %p82
      %p84 = scmp.ne.s32.totalorder %s73, %s74
      %p85 = scmp.eq.s32.totalorder %s18, 0
      %p86 = por %p84, %p85
      %p87 = scmp.ne.s32.totalorder %s73, %s74
      %p88 = scmp.eq.s32.totalorder %s19, 1
      %p89 = por %p87, %p88
      %p91 = scmp.ne.s32.totalorder %s74, %s90
      %p92 = scmp.eq.s32.totalorder %s19, 0
      %p93 = por %p91, %p92
      %s94 = ssub.s32 %s13, %s20
      %p95 = scmp.eq.s32.totalorder %s94, 0
      %s97 = sadd.s32 %s96, 1
      %s98 = scalar_select %p95, %s96, %s97
      %p101 = pneg %p95
      %p102 = scmp.eq.s32.totalorder %s13, 1
      %p103 = por %p101, %p102
      %p104 = scmp.ne.s32.totalorder %s96, %s99
      %p105 = scmp.eq.s32.totalorder %s13, 0
      %p106 = por %p104, %p105
      %p107 = scmp.ne.s32.totalorder %s96, %s99
      %p108 = scmp.eq.s32.totalorder %s18, 1
      %p109 = por %p107, %p108
      %p110 = scmp.ne.s32.totalorder %s99, %s100
      %p111 = scmp.eq.s32.totalorder %s18, 0
      %p112 = por %p110, %p111
      %p113 = scmp.ne.s32.totalorder %s99, %s100
      %p114 = scmp.eq.s32.totalorder %s19, 1
      %p115 = por %p113, %p114
      %p117 = scmp.ne.s32.totalorder %s100, %s116
      %p118 = scmp.eq.s32.totalorder %s19, 0
      %p119 = por %p117, %p118
      %p120 = scmp.le.s32.totalorder 1, %s13
      %p121 = scmp.lt.s32.totalorder %s13, 3
      %p122 = pnand %p120, %p121
      %p123 = pneg %p122
      // Predicated region
      $region9: #{tpu_custom_call.1} parent=5 // pred_check
        _
      $region10: #{tpu_custom_call.1} parent=5 // pred_check_branch
        %125 = sbr.rel (%p122) target = $region12
      $region11: #{tpu_custom_call.1} parent=5 // pred_region
        %s126 = ssub.s32 %s13, 1
        // Predicated region
        $region13: #{tpu_custom_call.1} parent=11 // pred_check
          %p127 = pneg %p60
        $region14: #{tpu_custom_call.1} parent=11 // pred_check_branch
          %129 = sbr.rel (%p127) target = $region16
        $region15: #{tpu_custom_call.1} parent=11 // pred_region
          _
        $region16: #{tpu_custom_call.1} parent=11 // pred_fallthru
          _
      $region12: #{tpu_custom_call.1} parent=5 // pred_fallthru
        _
      %p130 = scmp.lt.s32.totalorder %s13, 2
      // Predicated region
      $region17: #{tpu_custom_call.1} parent=5 // pred_check
        %p131 = pneg %p130
      $region18: #{tpu_custom_call.1} parent=5 // pred_check_branch
        %133 = sbr.rel (%p131) target = $region20
      $region19: #{tpu_custom_call.1} parent=5 // pred_region
        // Predicated region
        $region21: #{tpu_custom_call.1} parent=19 // pred_check
          %p134 = pneg %p33
        $region22: #{tpu_custom_call.1} parent=19 // pred_check_branch
          %136 = sbr.rel (%p134) target = $region24
        $region23: #{tpu_custom_call.1} parent=19 // pred_region
          %p137 = scmp.lt.s32.totalorder %s13, 1
          %s138 = scalar_select %p137, %s13, 1
          %s139 = smul.addr %s138, 54
          %s140 = smul.addr %s139, 4
          %s141 = scalar_lea.vmem %s0, %s140
        $region24: #{tpu_custom_call.1} parent=19 // pred_fallthru
          _
      $region20: #{tpu_custom_call.1} parent=5 // pred_fallthru
        _
      %p142 = scmp.le.s32.totalorder 1, %s13
      %p143 = scmp.lt.s32.totalorder %s13, 3
      %p144 = pnand %p142, %p143
      %p145 = pneg %p144
      // Predicated region
      $region25: #{tpu_custom_call.1} parent=5 // pred_check
        _
      $region26: #{tpu_custom_call.1} parent=5 // pred_check_branch
        %147 = sbr.rel (%p144) target = $region28
      $region27: #{tpu_custom_call.1} parent=5 // pred_region
        %s148 = ssub.s32 %s13, 1
        %p149 = scmp.lt.s32.totalorder %s18, 1
        %s150 = scalar_select %p149, %s18, 1
        %s151 = smul.addr %s150, 54
        %s152 = smul.addr %s151, 4
        %s153 = scalar_lea.vmem %s0, %s152
        %p154 = pneg %p39
        %p155 = pneg %p36
        %p156 = pneg %p60
        %p157 = pneg %p57
        %p158 = pneg %p86
        %p159 = pneg %p83
        %p160 = scmp.lt.s32.totalorder %s18, 1
        %s161 = scalar_select %p160, %s18, 1
        %s162 = smul.addr %s161, 32
        %s163 = smul.addr %s162, 4
        %s164 = scalar_lea.vmem %s2, %s163
        %p165 = pneg %p112
        %p166 = pneg %p109
        %s167 = sand.u32 %s99, 1
        %s168 = scalar_lea.sflag [#allocation3], %s167
        %s169 = sand.u32 %s99, 1
        %s170 = smul.addr %s169, 2
        %s171 = scalar_lea.vmem [#allocation2], %s170
        %p172 = scmp.lt.s32.totalorder %s18, 1
        %s173 = scalar_select %p172, %s18, 1
        %s174 = smul.addr %s173, 54
        %s175 = smul.addr %s174, 4
        %s176 = scalar_lea.vmem %s0, %s175
        %p177 = scmp.lt.s32.totalorder %s18, 1
        %s178 = scalar_select %p177, %s18, 1
        %s179 = smul.addr %s178, 32
        %s180 = smul.addr %s179, 4
        %s181 = scalar_lea.vmem %s2, %s180
        %v183 = vld [vmem:[%s176] sm:$0xf]
        %v184 = vld [vmem:[%s176 + $0x4] sm:$0xf]
        %v185 = vld [vmem:[%s176 + $0x8] sm:$0x1]
        %v186 = vld [vmem:[%s176 + $0xc] sm:$0xf]
        %v187 = vld [vmem:[%s176 + $0x10] sm:$0xf]
        %v188 = vld [vmem:[%s176 + $0x14] sm:$0x1]
        %v189 = vld [vmem:[%s176 + $0x18] sm:$0xf]
        %v190 = vld [vmem:[%s176 + $0x1c] sm:$0xf]
        %v191 = vld [vmem:[%s176 + $0x20] sm:$0x1]
        %v192 = vld [vmem:[%s176 + $0x24] sm:$0xf]
        %v193 = vld [vmem:[%s176 + $0x28] sm:$0xf]
        %v194 = vld [vmem:[%s176 + $0x2c] sm:$0x1]
        %v195 = vld [vmem:[%s176 + $0x30] sm:$0xf]
        %v196 = vld [vmem:[%s176 + $0x34] sm:$0xf]
        %v197 = vld [vmem:[%s176 + $0x38] sm:$0x1]
        %v198 = vld [vmem:[%s176 + $0x3c] sm:$0xf]
        %v199 = vld [vmem:[%s176 + $0x40] sm:$0xf]
        %v200 = vld [vmem:[%s176 + $0x44] sm:$0x1]
        %v201 = vld [vmem:[%s176 + $0x48] sm:$0xf]
        %v202 = vld [vmem:[%s176 + $0x4c] sm:$0xf]
        %v203 = vld [vmem:[%s176 + $0x50] sm:$0x1]
        %v204 = vld [vmem:[%s176 + $0x54] sm:$0xf]
        %v205 = vld [vmem:[%s176 + $0x58] sm:$0xf]
        %v206 = vld [vmem:[%s176 + $0x5c] sm:$0x1]
        %v207 = vld [vmem:[%s176 + $0x60] sm:$0xf]
        %v208 = vld [vmem:[%s176 + $0x64] sm:$0xf]
        %v209 = vld [vmem:[%s176 + $0x68] sm:$0x1]
        %v210 = vld [vmem:[%s176 + $0x6c] sm:$0xf]
        %v211 = vld [vmem:[%s176 + $0x70] sm:$0xf]
        %v212 = vld [vmem:[%s176 + $0x74] sm:$0x1]
        %v213 = vld [vmem:[%s176 + $0x78] sm:$0xf]
        %v214 = vld [vmem:[%s176 + $0x7c] sm:$0xf]
        %v215 = vld [vmem:[%s176 + $0x80] sm:$0x1]
        %v216 = vld [vmem:[%s176 + $0x84] sm:$0xf]
        %v217 = vld [vmem:[%s176 + $0x88] sm:$0xf]
        %v218 = vld [vmem:[%s176 + $0x8c] sm:$0x1]
        %v219 = vld [vmem:[%s176 + $0x90] sm:$0xf]
        %v220 = vld [vmem:[%s176 + $0x94] sm:$0xf]
        %v221 = vld [vmem:[%s176 + $0x98] sm:$0x1]
        %v222 = vld [vmem:[%s176 + $0x9c] sm:$0xf]
        %v223 = vld [vmem:[%s176 + $0xa0] sm:$0xf]
        %v224 = vld [vmem:[%s176 + $0xa4] sm:$0x1]
        %v225 = vld [vmem:[%s176 + $0xa8] sm:$0xf]
        %v226 = vld [vmem:[%s176 + $0xac] sm:$0xf]
        %v227 = vld [vmem:[%s176 + $0xb0] sm:$0x1]
        %v228 = vld [vmem:[%s176 + $0xb4] sm:$0xf]
        %v229 = vld [vmem:[%s176 + $0xb8] sm:$0xf]
        %v230 = vld [vmem:[%s176 + $0xbc] sm:$0x1]
        %v231 = vld [vmem:[%s176 + $0xc0] sm:$0xf]
        %v232 = vld [vmem:[%s176 + $0xc4] sm:$0xf]
        %v233 = vld [vmem:[%s176 + $0xc8] sm:$0x1]
        %v234 = vld [vmem:[%s176 + $0xcc] sm:$0xf]
        %v235 = vld [vmem:[%s176 + $0xd0] sm:$0xf]
        %v236 = vld [vmem:[%s176 + $0xd4] sm:$0x1]
        %v237 = vunpack.c.l.bf16 %v183
        %v238 = vunpack.c.l.bf16 %v184
        %v239 = vunpack.c.l.bf16 %v185
        %v240 = vunpack.c.l.bf16 %v186
        %v241 = vunpack.c.l.bf16 %v187
        %v242 = vunpack.c.l.bf16 %v188
        %v243 = vunpack.c.l.bf16 %v189
        %v244 = vunpack.c.l.bf16 %v190
        %v245 = vunpack.c.l.bf16 %v191
        %v246 = vunpack.c.l.bf16 %v192
        %v247 = vunpack.c.l.bf16 %v193
        %v248 = vunpack.c.l.bf16 %v194
        %v249 = vunpack.c.l.bf16 %v195
        %v250 = vunpack.c.l.bf16 %v196
        %v251 = vunpack.c.l.bf16 %v197
        %v252 = vunpack.c.l.bf16 %v198
        %v253 = vunpack.c.l.bf16 %v199
        %v254 = vunpack.c.l.bf16 %v200
        %v255 = vunpack.c.l.bf16 %v201
        %v256 = vunpack.c.l.bf16 %v202
        %v257 = vunpack.c.l.bf16 %v203
        %v258 = vunpack.c.l.bf16 %v204
        %v259 = vunpack.c.l.bf16 %v205
        %v260 = vunpack.c.l.bf16 %v206
        %v261 = vunpack.c.l.bf16 %v207
        %v262 = vunpack.c.l.bf16 %v208
        %v263 = vunpack.c.l.bf16 %v209
        %v264 = vunpack.c.l.bf16 %v210
        %v265 = vunpack.c.l.bf16 %v211
        %v266 = vunpack.c.l.bf16 %v212
        %v267 = vunpack.c.l.bf16 %v213
        %v268 = vunpack.c.l.bf16 %v214
        %v269 = vunpack.c.l.bf16 %v215
        %v270 = vunpack.c.l.bf16 %v216
        %v271 = vunpack.c.l.bf16 %v217
        %v272 = vunpack.c.l.bf16 %v218
        %v273 = vunpack.c.l.bf16 %v219
        %v274 = vunpack.c.l.bf16 %v220
        %v275 = vunpack.c.l.bf16 %v221
        %v276 = vunpack.c.l.bf16 %v222
        %v277 = vunpack.c.l.bf16 %v223
        %v278 = vunpack.c.l.bf16 %v224
        %v279 = vunpack.c.l.bf16 %v225
        %v280 = vunpack.c.l.bf16 %v226
        %v281 = vunpack.c.l.bf16 %v227
        %v282 = vunpack.c.l.bf16 %v228
        %v283 = vunpack.c.l.bf16 %v229
        %v284 = vunpack.c.l.bf16 %v230
        %v285 = vunpack.c.l.bf16 %v231
        %v286 = vunpack.c.l.bf16 %v232
        %v287 = vunpack.c.l.bf16 %v233
        %v288 = vunpack.c.l.bf16 %v234
        %v289 = vunpack.c.l.bf16 %v235
        %v290 = vunpack.c.l.bf16 %v236
        %vm339 = vcmask 1046528
        %v340 = vrot.slane %v237, 1
        %v341 = vrot.slane %v238, 1
        %v342 = vsel %vm339, %v340, %v341
        %v343 = vrot.slane %v239, 1
        %v344 = vsel %vm339, %v341, %v343
        %v345 = vrot.slane %v240, 1
        %v346 = vrot.slane %v241, 1
        %v347 = vsel %vm339, %v345, %v346
        %v348 = vrot.slane %v242, 1
        %v349 = vsel %vm339, %v346, %v348
        %v350 = vrot.slane %v243, 1
        %v351 = vrot.slane %v244, 1
        %v352 = vsel %vm339, %v350, %v351
        %v353 = vrot.slane %v245, 1
        %v354 = vsel %vm339, %v351, %v353
        %v355 = vrot.slane %v246, 1
        %v356 = vrot.slane %v247, 1
        %v357 = vsel %vm339, %v355, %v356
        %v358 = vrot.slane %v248, 1
        %v359 = vsel %vm339, %v356, %v358
        %v360 = vrot.slane %v249, 1
        %v361 = vrot.slane %v250, 1
        %v362 = vsel %vm339, %v360, %v361
        %v363 = vrot.slane %v251, 1
        %v364 = vsel %vm339, %v361, %v363
        %v365 = vrot.slane %v252, 1
        %v366 = vrot.slane %v253, 1
        %v367 = vsel %vm339, %v365, %v366
        %v368 = vrot.slane %v254, 1
        %v369 = vsel %vm339, %v366, %v368
        %v370 = vrot.slane %v255, 1
        %v371 = vrot.slane %v256, 1
        %v372 = vsel %vm339, %v370, %v371
        %v373 = vrot.slane %v257, 1
        %v374 = vsel %vm339, %v371, %v373
        %v375 = vrot.slane %v258, 1
        %v376 = vrot.slane %v259, 1
        %v377 = vsel %vm339, %v375, %v376
        %v378 = vrot.slane %v260, 1
        %v379 = vsel %vm339, %v376, %v378
        %v380 = vrot.slane %v261, 1
        %v381 = vrot.slane %v262, 1
        %v382 = vsel %vm339, %v380, %v381
        %v383 = vrot.slane %v263, 1
        %v384 = vsel %vm339, %v381, %v383
        %v385 = vrot.slane %v264, 1
        %v386 = vrot.slane %v265, 1
        %v387 = vsel %vm339, %v385, %v386
        %v388 = vrot.slane %v266, 1
        %v389 = vsel %vm339, %v386, %v388
        %v390 = vrot.slane %v267, 1
        %v391 = vrot.slane %v268, 1
        %v392 = vsel %vm339, %v390, %v391
        %v393 = vrot.slane %v269, 1
        %v394 = vsel %vm339, %v391, %v393
        %v395 = vrot.slane %v270, 1
        %v396 = vrot.slane %v271, 1
        %v397 = vsel %vm339, %v395, %v396
        %v398 = vrot.slane %v272, 1
        %v399 = vsel %vm339, %v396, %v398
        %v400 = vrot.slane %v273, 1
        %v401 = vrot.slane %v274, 1
        %v402 = vsel %vm339, %v400, %v401
        %v403 = vrot.slane %v275, 1
        %v404 = vsel %vm339, %v401, %v403
        %v405 = vrot.slane %v276, 1
        %v406 = vrot.slane %v277, 1
        %v407 = vsel %vm339, %v405, %v406
        %v408 = vrot.slane %v278, 1
        %v409 = vsel %vm339, %v406, %v408
        %v410 = vrot.slane %v279, 1
        %v411 = vrot.slane %v280, 1
        %v412 = vsel %vm339, %v410, %v411
        %v413 = vrot.slane %v281, 1
        %v414 = vsel %vm339, %v411, %v413
        %v415 = vrot.slane %v282, 1
        %v416 = vrot.slane %v283, 1
        %v417 = vsel %vm339, %v415, %v416
        %v418 = vrot.slane %v284, 1
        %v419 = vsel %vm339, %v416, %v418
        %420 = vrot.lane.b32.xlu0 %v342, 4
        %v421 = vpop.permute.xlu0 %420
        %422 = vrot.lane.b32.xlu0 %v344, 4
        %v423 = vpop.permute.xlu0 %422
        %424 = vrot.lane.b32.xlu0 %v347, 4
        %v425 = vpop.permute.xlu0 %424
        %426 = vrot.lane.b32.xlu0 %v349, 4
        %v427 = vpop.permute.xlu0 %426
        %428 = vrot.lane.b32.xlu0 %v352, 4
        %v429 = vpop.permute.xlu0 %428
        %430 = vrot.lane.b32.xlu0 %v354, 4
        %v431 = vpop.permute.xlu0 %430
        %432 = vrot.lane.b32.xlu0 %v357, 4
        %v433 = vpop.permute.xlu0 %432
        %434 = vrot.lane.b32.xlu0 %v359, 4
        %v435 = vpop.permute.xlu0 %434
        %436 = vrot.lane.b32.xlu0 %v362, 4
        %v437 = vpop.permute.xlu0 %436
        %438 = vrot.lane.b32.xlu0 %v364, 4
        %v439 = vpop.permute.xlu0 %438
        %440 = vrot.lane.b32.xlu0 %v367, 4
        %v441 = vpop.permute.xlu0 %440
        %442 = vrot.lane.b32.xlu0 %v369, 4
        %v443 = vpop.permute.xlu0 %442
        %444 = vrot.lane.b32.xlu0 %v372, 4
        %v445 = vpop.permute.xlu0 %444
        %446 = vrot.lane.b32.xlu0 %v374, 4
        %v447 = vpop.permute.xlu0 %446
        %448 = vrot.lane.b32.xlu0 %v377, 4
        %v449 = vpop.permute.xlu0 %448
        %450 = vrot.lane.b32.xlu0 %v379, 4
        %v451 = vpop.permute.xlu0 %450
        %452 = vrot.lane.b32.xlu0 %v382, 4
        %v453 = vpop.permute.xlu0 %452
        %454 = vrot.lane.b32.xlu0 %v384, 4
        %v455 = vpop.permute.xlu0 %454
        %456 = vrot.lane.b32.xlu0 %v387, 4
        %v457 = vpop.permute.xlu0 %456
        %458 = vrot.lane.b32.xlu0 %v389, 4
        %v459 = vpop.permute.xlu0 %458
        %460 = vrot.lane.b32.xlu0 %v392, 4
        %v461 = vpop.permute.xlu0 %460
        %462 = vrot.lane.b32.xlu0 %v394, 4
        %v463 = vpop.permute.xlu0 %462
        %464 = vrot.lane.b32.xlu0 %v397, 4
        %v465 = vpop.permute.xlu0 %464
        %466 = vrot.lane.b32.xlu0 %v399, 4
        %v467 = vpop.permute.xlu0 %466
        %468 = vrot.lane.b32.xlu0 %v402, 4
        %v469 = vpop.permute.xlu0 %468
        %470 = vrot.lane.b32.xlu0 %v404, 4
        %v471 = vpop.permute.xlu0 %470
        %472 = vrot.lane.b32.xlu0 %v407, 4
        %v473 = vpop.permute.xlu0 %472
        %474 = vrot.lane.b32.xlu0 %v409, 4
        %v475 = vpop.permute.xlu0 %474
        %476 = vrot.lane.b32.xlu0 %v412, 4
        %v477 = vpop.permute.xlu0 %476
        %478 = vrot.lane.b32.xlu0 %v414, 4
        %v479 = vpop.permute.xlu0 %478
        %480 = vrot.lane.b32.xlu0 %v417, 4
        %v481 = vpop.permute.xlu0 %480
        %482 = vrot.lane.b32.xlu0 %v419, 4
        %v483 = vpop.permute.xlu0 %482
        %vm516 = vcmask 1045504
        %v517 = vrot.slane %v237, 2
        %v518 = vrot.slane %v238, 2
        %v519 = vsel %vm516, %v517, %v518
        %v520 = vrot.slane %v239, 2
        %v521 = vsel %vm516, %v518, %v520
        %v522 = vrot.slane %v240, 2
        %v523 = vrot.slane %v241, 2
        %v524 = vsel %vm516, %v522, %v523
        %v525 = vrot.slane %v242, 2
        %v526 = vsel %vm516, %v523, %v525
        %v527 = vrot.slane %v243, 2
        %v528 = vrot.slane %v244, 2
        %v529 = vsel %vm516, %v527, %v528
        %v530 = vrot.slane %v245, 2
        %v531 = vsel %vm516, %v528, %v530
        %v532 = vrot.slane %v246, 2
        %v533 = vrot.slane %v247, 2
        %v534 = vsel %vm516, %v532, %v533
        %v535 = vrot.slane %v248, 2
        %v536 = vsel %vm516, %v533, %v535
        %v537 = vrot.slane %v249, 2
        %v538 = vrot.slane %v250, 2
        %v539 = vsel %vm516, %v537, %v538
        %v540 = vrot.slane %v251, 2
        %v541 = vsel %vm516, %v538, %v540
        %v542 = vrot.slane %v252, 2
        %v543 = vrot.slane %v253, 2
        %v544 = vsel %vm516, %v542, %v543
        %v545 = vrot.slane %v254, 2
        %v546 = vsel %vm516, %v543, %v545
        %v547 = vrot.slane %v255, 2
        %v548 = vrot.slane %v256, 2
        %v549 = vsel %vm516, %v547, %v548
        %v550 = vrot.slane %v257, 2
        %v551 = vsel %vm516, %v548, %v550
        %v552 = vrot.slane %v258, 2
        %v553 = vrot.slane %v259, 2
        %v554 = vsel %vm516, %v552, %v553
        %v555 = vrot.slane %v260, 2
        %v556 = vsel %vm516, %v553, %v555
        %v557 = vrot.slane %v261, 2
        %v558 = vrot.slane %v262, 2
        %v559 = vsel %vm516, %v557, %v558
        %v560 = vrot.slane %v263, 2
        %v561 = vsel %vm516, %v558, %v560
        %v562 = vrot.slane %v264, 2
        %v563 = vrot.slane %v265, 2
        %v564 = vsel %vm516, %v562, %v563
        %v565 = vrot.slane %v266, 2
        %v566 = vsel %vm516, %v563, %v565
        %v567 = vrot.slane %v267, 2
        %v568 = vrot.slane %v268, 2
        %v569 = vsel %vm516, %v567, %v568
        %v570 = vrot.slane %v269, 2
        %v571 = vsel %vm516, %v568, %v570
        %v572 = vrot.slane %v270, 2
        %v573 = vrot.slane %v271, 2
        %v574 = vsel %vm516, %v572, %v573
        %v575 = vrot.slane %v272, 2
        %v576 = vsel %vm516, %v573, %v575
        %v577 = vrot.slane %v273, 2
        %v578 = vrot.slane %v274, 2
        %v579 = vsel %vm516, %v577, %v578
        %v580 = vrot.slane %v275, 2
        %v581 = vsel %vm516, %v578, %v580
        %v582 = vrot.slane %v276, 2
        %v583 = vrot.slane %v277, 2
        %v584 = vsel %vm516, %v582, %v583
        %v585 = vrot.slane %v278, 2
        %v586 = vsel %vm516, %v583, %v585
        %v587 = vrot.slane %v279, 2
        %v588 = vrot.slane %v280, 2
        %v589 = vsel %vm516, %v587, %v588
        %v590 = vrot.slane %v281, 2
        %v591 = vsel %vm516, %v588, %v590
        %v592 = vrot.slane %v282, 2
        %v593 = vrot.slane %v283, 2
        %v594 = vsel %vm516, %v592, %v593
        %v595 = vrot.slane %v284, 2
        %v596 = vsel %vm516, %v593, %v595
        %597 = vrot.lane.b32.xlu0 %v519, 8
        %v598 = vpop.permute.xlu0 %597
        %599 = vrot.lane.b32.xlu0 %v521, 8
        %v600 = vpop.permute.xlu0 %599
        %601 = vrot.lane.b32.xlu0 %v524, 8
        %v602 = vpop.permute.xlu0 %601
        %603 = vrot.lane.b32.xlu0 %v526, 8
        %v604 = vpop.permute.xlu0 %603
        %605 = vrot.lane.b32.xlu0 %v529, 8
        %v606 = vpop.permute.xlu0 %605
        %607 = vrot.lane.b32.xlu0 %v531, 8
        %v608 = vpop.permute.xlu0 %607
        %609 = vrot.lane.b32.xlu0 %v534, 8
        %v610 = vpop.permute.xlu0 %609
        %611 = vrot.lane.b32.xlu0 %v536, 8
        %v612 = vpop.permute.xlu0 %611
        %613 = vrot.lane.b32.xlu0 %v539, 8
        %v614 = vpop.permute.xlu0 %613
        %615 = vrot.lane.b32.xlu0 %v541, 8
        %v616 = vpop.permute.xlu0 %615
        %617 = vrot.lane.b32.xlu0 %v544, 8
        %v618 = vpop.permute.xlu0 %617
        %619 = vrot.lane.b32.xlu0 %v546, 8
        %v620 = vpop.permute.xlu0 %619
        %621 = vrot.lane.b32.xlu0 %v549, 8
        %v622 = vpop.permute.xlu0 %621
        %623 = vrot.lane.b32.xlu0 %v551, 8
        %v624 = vpop.permute.xlu0 %623
        %625 = vrot.lane.b32.xlu0 %v554, 8
        %v626 = vpop.permute.xlu0 %625
        %627 = vrot.lane.b32.xlu0 %v556, 8
        %v628 = vpop.permute.xlu0 %627
        %629 = vrot.lane.b32.xlu0 %v559, 8
        %v630 = vpop.permute.xlu0 %629
        %631 = vrot.lane.b32.xlu0 %v561, 8
        %v632 = vpop.permute.xlu0 %631
        %633 = vrot.lane.b32.xlu0 %v564, 8
        %v634 = vpop.permute.xlu0 %633
        %635 = vrot.lane.b32.xlu0 %v566, 8
        %v636 = vpop.permute.xlu0 %635
        %637 = vrot.lane.b32.xlu0 %v569, 8
        %v638 = vpop.permute.xlu0 %637
        %639 = vrot.lane.b32.xlu0 %v571, 8
        %v640 = vpop.permute.xlu0 %639
        %641 = vrot.lane.b32.xlu0 %v574, 8
        %v642 = vpop.permute.xlu0 %641
        %643 = vrot.lane.b32.xlu0 %v576, 8
        %v644 = vpop.permute.xlu0 %643
        %645 = vrot.lane.b32.xlu0 %v579, 8
        %v646 = vpop.permute.xlu0 %645
        %647 = vrot.lane.b32.xlu0 %v581, 8
        %v648 = vpop.permute.xlu0 %647
        %649 = vrot.lane.b32.xlu0 %v584, 8
        %v650 = vpop.permute.xlu0 %649
        %651 = vrot.lane.b32.xlu0 %v586, 8
        %v652 = vpop.permute.xlu0 %651
        %653 = vrot.lane.b32.xlu0 %v589, 8
        %v654 = vpop.permute.xlu0 %653
        %655 = vrot.lane.b32.xlu0 %v591, 8
        %v656 = vpop.permute.xlu0 %655
        %657 = vrot.lane.b32.xlu0 %v594, 8
        %v658 = vpop.permute.xlu0 %657
        %659 = vrot.lane.b32.xlu0 %v596, 8
        %v660 = vpop.permute.xlu0 %659
        %695 = vrot.lane.b32.xlu0 %v240, 12
        %v696 = vpop.permute.xlu0 %695
        %697 = vrot.lane.b32.xlu0 %v241, 12
        %v698 = vpop.permute.xlu0 %697
        %699 = vrot.lane.b32.xlu0 %v243, 12
        %v700 = vpop.permute.xlu0 %699
        %701 = vrot.lane.b32.xlu0 %v244, 12
        %v702 = vpop.permute.xlu0 %701
        %703 = vrot.lane.b32.xlu0 %v246, 12
        %v704 = vpop.permute.xlu0 %703
        %705 = vrot.lane.b32.xlu0 %v247, 12
        %v706 = vpop.permute.xlu0 %705
        %707 = vrot.lane.b32.xlu0 %v249, 12
        %v708 = vpop.permute.xlu0 %707
        %709 = vrot.lane.b32.xlu0 %v250, 12
        %v710 = vpop.permute.xlu0 %709
        %711 = vrot.lane.b32.xlu0 %v252, 12
        %v712 = vpop.permute.xlu0 %711
        %713 = vrot.lane.b32.xlu0 %v253, 12
        %v714 = vpop.permute.xlu0 %713
        %715 = vrot.lane.b32.xlu0 %v255, 12
        %v716 = vpop.permute.xlu0 %715
        %717 = vrot.lane.b32.xlu0 %v256, 12
        %v718 = vpop.permute.xlu0 %717
        %719 = vrot.lane.b32.xlu0 %v258, 12
        %v720 = vpop.permute.xlu0 %719
        %721 = vrot.lane.b32.xlu0 %v259, 12
        %v722 = vpop.permute.xlu0 %721
        %723 = vrot.lane.b32.xlu0 %v261, 12
        %v724 = vpop.permute.xlu0 %723
        %725 = vrot.lane.b32.xlu0 %v262, 12
        %v726 = vpop.permute.xlu0 %725
        %727 = vrot.lane.b32.xlu0 %v264, 12
        %v728 = vpop.permute.xlu0 %727
        %729 = vrot.lane.b32.xlu0 %v265, 12
        %v730 = vpop.permute.xlu0 %729
        %731 = vrot.lane.b32.xlu0 %v267, 12
        %v732 = vpop.permute.xlu0 %731
        %733 = vrot.lane.b32.xlu0 %v268, 12
        %v734 = vpop.permute.xlu0 %733
        %735 = vrot.lane.b32.xlu0 %v270, 12
        %v736 = vpop.permute.xlu0 %735
        %737 = vrot.lane.b32.xlu0 %v271, 12
        %v738 = vpop.permute.xlu0 %737
        %739 = vrot.lane.b32.xlu0 %v273, 12
        %v740 = vpop.permute.xlu0 %739
        %741 = vrot.lane.b32.xlu0 %v274, 12
        %v742 = vpop.permute.xlu0 %741
        %743 = vrot.lane.b32.xlu0 %v276, 12
        %v744 = vpop.permute.xlu0 %743
        %745 = vrot.lane.b32.xlu0 %v277, 12
        %v746 = vpop.permute.xlu0 %745
        %747 = vrot.lane.b32.xlu0 %v279, 12
        %v748 = vpop.permute.xlu0 %747
        %749 = vrot.lane.b32.xlu0 %v280, 12
        %v750 = vpop.permute.xlu0 %749
        %751 = vrot.lane.b32.xlu0 %v282, 12
        %v752 = vpop.permute.xlu0 %751
        %753 = vrot.lane.b32.xlu0 %v283, 12
        %v754 = vpop.permute.xlu0 %753
        %755 = vrot.lane.b32.xlu0 %v285, 12
        %v756 = vpop.permute.xlu0 %755
        %757 = vrot.lane.b32.xlu0 %v286, 12
        %v758 = vpop.permute.xlu0 %757
        %v792 = vrot.slane %v285, 1
        %v793 = vrot.slane %v286, 1
        %v794 = vsel %vm339, %v792, %v793
        %v795 = vrot.slane %v287, 1
        %v796 = vsel %vm339, %v793, %v795
        %797 = vrot.lane.b32.xlu0 %v347, 16
        %v798 = vpop.permute.xlu0 %797
        %799 = vrot.lane.b32.xlu0 %v349, 16
        %v800 = vpop.permute.xlu0 %799
        %801 = vrot.lane.b32.xlu0 %v352, 16
        %v802 = vpop.permute.xlu0 %801
        %803 = vrot.lane.b32.xlu0 %v354, 16
        %v804 = vpop.permute.xlu0 %803
        %805 = vrot.lane.b32.xlu0 %v357, 16
        %v806 = vpop.permute.xlu0 %805
        %807 = vrot.lane.b32.xlu0 %v359, 16
        %v808 = vpop.permute.xlu0 %807
        %809 = vrot.lane.b32.xlu0 %v362, 16
        %v810 = vpop.permute.xlu0 %809
        %811 = vrot.lane.b32.xlu0 %v364, 16
        %v812 = vpop.permute.xlu0 %811
        %813 = vrot.lane.b32.xlu0 %v367, 16
        %v814 = vpop.permute.xlu0 %813
        %815 = vrot.lane.b32.xlu0 %v369, 16
        %v816 = vpop.permute.xlu0 %815
        %817 = vrot.lane.b32.xlu0 %v372, 16
        %v818 = vpop.permute.xlu0 %817
        %819 = vrot.lane.b32.xlu0 %v374, 16
        %v820 = vpop.permute.xlu0 %819
        %821 = vrot.lane.b32.xlu0 %v377, 16
        %v822 = vpop.permute.xlu0 %821
        %823 = vrot.lane.b32.xlu0 %v379, 16
        %v824 = vpop.permute.xlu0 %823
        %825 = vrot.lane.b32.xlu0 %v382, 16
        %v826 = vpop.permute.xlu0 %825
        %827 = vrot.lane.b32.xlu0 %v384, 16
        %v828 = vpop.permute.xlu0 %827
        %829 = vrot.lane.b32.xlu0 %v387, 16
        %v830 = vpop.permute.xlu0 %829
        %831 = vrot.lane.b32.xlu0 %v389, 16
        %v832 = vpop.permute.xlu0 %831
        %833 = vrot.lane.b32.xlu0 %v392, 16
        %v834 = vpop.permute.xlu0 %833
        %835 = vrot.lane.b32.xlu0 %v394, 16
        %v836 = vpop.permute.xlu0 %835
        %837 = vrot.lane.b32.xlu0 %v397, 16
        %v838 = vpop.permute.xlu0 %837
        %839 = vrot.lane.b32.xlu0 %v399, 16
        %v840 = vpop.permute.xlu0 %839
        %841 = vrot.lane.b32.xlu0 %v402, 16
        %v842 = vpop.permute.xlu0 %841
        %843 = vrot.lane.b32.xlu0 %v404, 16
        %v844 = vpop.permute.xlu0 %843
        %845 = vrot.lane.b32.xlu0 %v407, 16
        %v846 = vpop.permute.xlu0 %845
        %847 = vrot.lane.b32.xlu0 %v409, 16
        %v848 = vpop.permute.xlu0 %847
        %849 = vrot.lane.b32.xlu0 %v412, 16
        %v850 = vpop.permute.xlu0 %849
        %851 = vrot.lane.b32.xlu0 %v414, 16
        %v852 = vpop.permute.xlu0 %851
        %853 = vrot.lane.b32.xlu0 %v417, 16
        %v854 = vpop.permute.xlu0 %853
        %855 = vrot.lane.b32.xlu0 %v419, 16
        %v856 = vpop.permute.xlu0 %855
        %857 = vrot.lane.b32.xlu0 %v794, 16
        %v858 = vpop.permute.xlu0 %857
        %859 = vrot.lane.b32.xlu0 %v796, 16
        %v860 = vpop.permute.xlu0 %859
        %v893 = vrot.slane %v285, 2
        %v894 = vrot.slane %v286, 2
        %v895 = vsel %vm516, %v893, %v894
        %v896 = vrot.slane %v287, 2
        %v897 = vsel %vm516, %v894, %v896
        %898 = vrot.lane.b32.xlu0 %v524, 20
        %v899 = vpop.permute.xlu0 %898
        %900 = vrot.lane.b32.xlu0 %v526, 20
        %v901 = vpop.permute.xlu0 %900
        %902 = vrot.lane.b32.xlu0 %v529, 20
        %v903 = vpop.permute.xlu0 %902
        %904 = vrot.lane.b32.xlu0 %v531, 20
        %v905 = vpop.permute.xlu0 %904
        %906 = vrot.lane.b32.xlu0 %v534, 20
        %v907 = vpop.permute.xlu0 %906
        %908 = vrot.lane.b32.xlu0 %v536, 20
        %v909 = vpop.permute.xlu0 %908
        %910 = vrot.lane.b32.xlu0 %v539, 20
        %v911 = vpop.permute.xlu0 %910
        %912 = vrot.lane.b32.xlu0 %v541, 20
        %v913 = vpop.permute.xlu0 %912
        %914 = vrot.lane.b32.xlu0 %v544, 20
        %v915 = vpop.permute.xlu0 %914
        %916 = vrot.lane.b32.xlu0 %v546, 20
        %v917 = vpop.permute.xlu0 %916
        %918 = vrot.lane.b32.xlu0 %v549, 20
        %v919 = vpop.permute.xlu0 %918
        %920 = vrot.lane.b32.xlu0 %v551, 20
        %v921 = vpop.permute.xlu0 %920
        %922 = vrot.lane.b32.xlu0 %v554, 20
        %v923 = vpop.permute.xlu0 %922
        %924 = vrot.lane.b32.xlu0 %v556, 20
        %v925 = vpop.permute.xlu0 %924
        %926 = vrot.lane.b32.xlu0 %v559, 20
        %v927 = vpop.permute.xlu0 %926
        %928 = vrot.lane.b32.xlu0 %v561, 20
        %v929 = vpop.permute.xlu0 %928
        %930 = vrot.lane.b32.xlu0 %v564, 20
        %v931 = vpop.permute.xlu0 %930
        %932 = vrot.lane.b32.xlu0 %v566, 20
        %v933 = vpop.permute.xlu0 %932
        %934 = vrot.lane.b32.xlu0 %v569, 20
        %v935 = vpop.permute.xlu0 %934
        %936 = vrot.lane.b32.xlu0 %v571, 20
        %v937 = vpop.permute.xlu0 %936
        %938 = vrot.lane.b32.xlu0 %v574, 20
        %v939 = vpop.permute.xlu0 %938
        %940 = vrot.lane.b32.xlu0 %v576, 20
        %v941 = vpop.permute.xlu0 %940
        %942 = vrot.lane.b32.xlu0 %v579, 20
        %v943 = vpop.permute.xlu0 %942
        %944 = vrot.lane.b32.xlu0 %v581, 20
        %v945 = vpop.permute.xlu0 %944
        %946 = vrot.lane.b32.xlu0 %v584, 20
        %v947 = vpop.permute.xlu0 %946
        %948 = vrot.lane.b32.xlu0 %v586, 20
        %v949 = vpop.permute.xlu0 %948
        %950 = vrot.lane.b32.xlu0 %v589, 20
        %v951 = vpop.permute.xlu0 %950
        %952 = vrot.lane.b32.xlu0 %v591, 20
        %v953 = vpop.permute.xlu0 %952
        %954 = vrot.lane.b32.xlu0 %v594, 20
        %v955 = vpop.permute.xlu0 %954
        %956 = vrot.lane.b32.xlu0 %v596, 20
        %v957 = vpop.permute.xlu0 %956
        %958 = vrot.lane.b32.xlu0 %v895, 20
        %v959 = vpop.permute.xlu0 %958
        %960 = vrot.lane.b32.xlu0 %v897, 20
        %v961 = vpop.permute.xlu0 %960
        %996 = vrot.lane.b32.xlu0 %v243, 24
        %v997 = vpop.permute.xlu0 %996
        %998 = vrot.lane.b32.xlu0 %v244, 24
        %v999 = vpop.permute.xlu0 %998
        %1000 = vrot.lane.b32.xlu0 %v246, 24
        %v1001 = vpop.permute.xlu0 %1000
        %1002 = vrot.lane.b32.xlu0 %v247, 24
        %v1003 = vpop.permute.xlu0 %1002
        %1004 = vrot.lane.b32.xlu0 %v249, 24
        %v1005 = vpop.permute.xlu0 %1004
        %1006 = vrot.lane.b32.xlu0 %v250, 24
        %v1007 = vpop.permute.xlu0 %1006
        %1008 = vrot.lane.b32.xlu0 %v252, 24
        %v1009 = vpop.permute.xlu0 %1008
        %1010 = vrot.lane.b32.xlu0 %v253, 24
        %v1011 = vpop.permute.xlu0 %1010
        %1012 = vrot.lane.b32.xlu0 %v255, 24
        %v1013 = vpop.permute.xlu0 %1012
        %1014 = vrot.lane.b32.xlu0 %v256, 24
        %v1015 = vpop.permute.xlu0 %1014
        %1016 = vrot.lane.b32.xlu0 %v258, 24
        %v1017 = vpop.permute.xlu0 %1016
        %1018 = vrot.lane.b32.xlu0 %v259, 24
        %v1019 = vpop.permute.xlu0 %1018
        %1020 = vrot.lane.b32.xlu0 %v261, 24
        %v1021 = vpop.permute.xlu0 %1020
        %1022 = vrot.lane.b32.xlu0 %v262, 24
        %v1023 = vpop.permute.xlu0 %1022
        %1024 = vrot.lane.b32.xlu0 %v264, 24
        %v1025 = vpop.permute.xlu0 %1024
        %1026 = vrot.lane.b32.xlu0 %v265, 24
        %v1027 = vpop.permute.xlu0 %1026
        %1028 = vrot.lane.b32.xlu0 %v267, 24
        %v1029 = vpop.permute.xlu0 %1028
        %1030 = vrot.lane.b32.xlu0 %v268, 24
        %v1031 = vpop.permute.xlu0 %1030
        %1032 = vrot.lane.b32.xlu0 %v270, 24
        %v1033 = vpop.permute.xlu0 %1032
        %1034 = vrot.lane.b32.xlu0 %v271, 24
        %v1035 = vpop.permute.xlu0 %1034
        %1036 = vrot.lane.b32.xlu0 %v273, 24
        %v1037 = vpop.permute.xlu0 %1036
        %1038 = vrot.lane.b32.xlu0 %v274, 24
        %v1039 = vpop.permute.xlu0 %1038
        %1040 = vrot.lane.b32.xlu0 %v276, 24
        %v1041 = vpop.permute.xlu0 %1040
        %1042 = vrot.lane.b32.xlu0 %v277, 24
        %v1043 = vpop.permute.xlu0 %1042
        %1044 = vrot.lane.b32.xlu0 %v279, 24
        %v1045 = vpop.permute.xlu0 %1044
        %1046 = vrot.lane.b32.xlu0 %v280, 24
        %v1047 = vpop.permute.xlu0 %1046
        %1048 = vrot.lane.b32.xlu0 %v282, 24
        %v1049 = vpop.permute.xlu0 %1048
        %1050 = vrot.lane.b32.xlu0 %v283, 24
        %v1051 = vpop.permute.xlu0 %1050
        %1052 = vrot.lane.b32.xlu0 %v285, 24
        %v1053 = vpop.permute.xlu0 %1052
        %1054 = vrot.lane.b32.xlu0 %v286, 24
        %v1055 = vpop.permute.xlu0 %1054
        %1056 = vrot.lane.b32.xlu0 %v288, 24
        %v1057 = vpop.permute.xlu0 %1056
        %1058 = vrot.lane.b32.xlu0 %v289, 24
        %v1059 = vpop.permute.xlu0 %1058
        %v1093 = vrot.slane %v288, 1
        %v1094 = vrot.slane %v289, 1
        %v1095 = vsel %vm339, %v1093, %v1094
        %v1096 = vrot.slane %v290, 1
        %v1097 = vsel %vm339, %v1094, %v1096
        %1098 = vrot.lane.b32.xlu0 %v352, 28
        %v1099 = vpop.permute.xlu0 %1098
        %1100 = vrot.lane.b32.xlu0 %v354, 28
        %v1101 = vpop.permute.xlu0 %1100
        %1102 = vrot.lane.b32.xlu0 %v357, 28
        %v1103 = vpop.permute.xlu0 %1102
        %1104 = vrot.lane.b32.xlu0 %v359, 28
        %v1105 = vpop.permute.xlu0 %1104
        %1106 = vrot.lane.b32.xlu0 %v362, 28
        %v1107 = vpop.permute.xlu0 %1106
        %1108 = vrot.lane.b32.xlu0 %v364, 28
        %v1109 = vpop.permute.xlu0 %1108
        %1110 = vrot.lane.b32.xlu0 %v367, 28
        %v1111 = vpop.permute.xlu0 %1110
        %1112 = vrot.lane.b32.xlu0 %v369, 28
        %v1113 = vpop.permute.xlu0 %1112
        %1114 = vrot.lane.b32.xlu0 %v372, 28
        %v1115 = vpop.permute.xlu0 %1114
        %1116 = vrot.lane.b32.xlu0 %v374, 28
        %v1117 = vpop.permute.xlu0 %1116
        %1118 = vrot.lane.b32.xlu0 %v377, 28
        %v1119 = vpop.permute.xlu0 %1118
        %1120 = vrot.lane.b32.xlu0 %v379, 28
        %v1121 = vpop.permute.xlu0 %1120
        %1122 = vrot.lane.b32.xlu0 %v382, 28
        %v1123 = vpop.permute.xlu0 %1122
        %1124 = vrot.lane.b32.xlu0 %v384, 28
        %v1125 = vpop.permute.xlu0 %1124
        %1126 = vrot.lane.b32.xlu0 %v387, 28
        %v1127 = vpop.permute.xlu0 %1126
        %1128 = vrot.lane.b32.xlu0 %v389, 28
        %v1129 = vpop.permute.xlu0 %1128
        %1130 = vrot.lane.b32.xlu0 %v392, 28
        %v1131 = vpop.permute.xlu0 %1130
        %1132 = vrot.lane.b32.xlu0 %v394, 28
        %v1133 = vpop.permute.xlu0 %1132
        %1134 = vrot.lane.b32.xlu0 %v397, 28
        %v1135 = vpop.permute.xlu0 %1134
        %1136 = vrot.lane.b32.xlu0 %v399, 28
        %v1137 = vpop.permute.xlu0 %1136
        %1138 = vrot.lane.b32.xlu0 %v402, 28
        %v1139 = vpop.permute.xlu0 %1138
        %1140 = vrot.lane.b32.xlu0 %v404, 28
        %v1141 = vpop.permute.xlu0 %1140
        %1142 = vrot.lane.b32.xlu0 %v407, 28
        %v1143 = vpop.permute.xlu0 %1142
        %1144 = vrot.lane.b32.xlu0 %v409, 28
        %v1145 = vpop.permute.xlu0 %1144
        %1146 = vrot.lane.b32.xlu0 %v412, 28
        %v1147 = vpop.permute.xlu0 %1146
        %1148 = vrot.lane.b32.xlu0 %v414, 28
        %v1149 = vpop.permute.xlu0 %1148
        %1150 = vrot.lane.b32.xlu0 %v417, 28
        %v1151 = vpop.permute.xlu0 %1150
        %1152 = vrot.lane.b32.xlu0 %v419, 28
        %v1153 = vpop.permute.xlu0 %1152
        %1154 = vrot.lane.b32.xlu0 %v794, 28
        %v1155 = vpop.permute.xlu0 %1154
        %1156 = vrot.lane.b32.xlu0 %v796, 28
        %v1157 = vpop.permute.xlu0 %1156
        %1158 = vrot.lane.b32.xlu0 %v1095, 28
        %v1159 = vpop.permute.xlu0 %1158
        %1160 = vrot.lane.b32.xlu0 %v1097, 28
        %v1161 = vpop.permute.xlu0 %1160
        %v1194 = vrot.slane %v288, 2
        %v1195 = vrot.slane %v289, 2
        %v1196 = vsel %vm516, %v1194, %v1195
        %v1197 = vrot.slane %v290, 2
        %v1198 = vsel %vm516, %v1195, %v1197
        %1199 = vrot.lane.b32.xlu0 %v529, 32
        %v1200 = vpop.permute.xlu0 %1199
        %1201 = vrot.lane.b32.xlu0 %v531, 32
        %v1202 = vpop.permute.xlu0 %1201
        %1203 = vrot.lane.b32.xlu0 %v534, 32
        %v1204 = vpop.permute.xlu0 %1203
        %1205 = vrot.lane.b32.xlu0 %v536, 32
        %v1206 = vpop.permute.xlu0 %1205
        %1207 = vrot.lane.b32.xlu0 %v539, 32
        %v1208 = vpop.permute.xlu0 %1207
        %1209 = vrot.lane.b32.xlu0 %v541, 32
        %v1210 = vpop.permute.xlu0 %1209
        %1211 = vrot.lane.b32.xlu0 %v544, 32
        %v1212 = vpop.permute.xlu0 %1211
        %1213 = vrot.lane.b32.xlu0 %v546, 32
        %v1214 = vpop.permute.xlu0 %1213
        %1215 = vrot.lane.b32.xlu0 %v549, 32
        %v1216 = vpop.permute.xlu0 %1215
        %1217 = vrot.lane.b32.xlu0 %v551, 32
        %v1218 = vpop.permute.xlu0 %1217
        %1219 = vrot.lane.b32.xlu0 %v554, 32
        %v1220 = vpop.permute.xlu0 %1219
        %1221 = vrot.lane.b32.xlu0 %v556, 32
        %v1222 = vpop.permute.xlu0 %1221
        %1223 = vrot.lane.b32.xlu0 %v559, 32
        %v1224 = vpop.permute.xlu0 %1223
        %1225 = vrot.lane.b32.xlu0 %v561, 32
        %v1226 = vpop.permute.xlu0 %1225
        %1227 = vrot.lane.b32.xlu0 %v564, 32
        %v1228 = vpop.permute.xlu0 %1227
        %1229 = vrot.lane.b32.xlu0 %v566, 32
        %v1230 = vpop.permute.xlu0 %1229
        %1231 = vrot.lane.b32.xlu0 %v569, 32
        %v1232 = vpop.permute.xlu0 %1231
        %1233 = vrot.lane.b32.xlu0 %v571, 32
        %v1234 = vpop.permute.xlu0 %1233
        %1235 = vrot.lane.b32.xlu0 %v574, 32
        %v1236 = vpop.permute.xlu0 %1235
        %1237 = vrot.lane.b32.xlu0 %v576, 32
        %v1238 = vpop.permute.xlu0 %1237
        %1239 = vrot.lane.b32.xlu0 %v579, 32
        %v1240 = vpop.permute.xlu0 %1239
        %1241 = vrot.lane.b32.xlu0 %v581, 32
        %v1242 = vpop.permute.xlu0 %1241
        %1243 = vrot.lane.b32.xlu0 %v584, 32
        %v1244 = vpop.permute.xlu0 %1243
        %1245 = vrot.lane.b32.xlu0 %v586, 32
        %v1246 = vpop.permute.xlu0 %1245
        %1247 = vrot.lane.b32.xlu0 %v589, 32
        %v1248 = vpop.permute.xlu0 %1247
        %1249 = vrot.lane.b32.xlu0 %v591, 32
        %v1250 = vpop.permute.xlu0 %1249
        %1251 = vrot.lane.b32.xlu0 %v594, 32
        %v1252 = vpop.permute.xlu0 %1251
        %1253 = vrot.lane.b32.xlu0 %v596, 32
        %v1254 = vpop.permute.xlu0 %1253
        %1255 = vrot.lane.b32.xlu0 %v895, 32
        %v1256 = vpop.permute.xlu0 %1255
        %1257 = vrot.lane.b32.xlu0 %v897, 32
        %v1258 = vpop.permute.xlu0 %1257
        %1259 = vrot.lane.b32.xlu0 %v1196, 32
        %v1260 = vpop.permute.xlu0 %1259
        %1261 = vrot.lane.b32.xlu0 %v1198, 32
        %v1262 = vpop.permute.xlu0 %1261
        %vm1295 = vcmask 31744
        %v1296 = vsel %vm1295, %v237, %v421
        %v1297 = vsel %vm1295, %v238, %v423
        %v1298 = vsel %vm1295, %v240, %v425
        %v1299 = vsel %vm1295, %v241, %v427
        %v1300 = vsel %vm1295, %v243, %v429
        %v1301 = vsel %vm1295, %v244, %v431
        %v1302 = vsel %vm1295, %v246, %v433
        %v1303 = vsel %vm1295, %v247, %v435
        %v1304 = vsel %vm1295, %v249, %v437
        %v1305 = vsel %vm1295, %v250, %v439
        %v1306 = vsel %vm1295, %v252, %v441
        %v1307 = vsel %vm1295, %v253, %v443
        %v1308 = vsel %vm1295, %v255, %v445
        %v1309 = vsel %vm1295, %v256, %v447
        %v1310 = vsel %vm1295, %v258, %v449
        %v1311 = vsel %vm1295, %v259, %v451
        %v1312 = vsel %vm1295, %v261, %v453
        %v1313 = vsel %vm1295, %v262, %v455
        %v1314 = vsel %vm1295, %v264, %v457
        %v1315 = vsel %vm1295, %v265, %v459
        %v1316 = vsel %vm1295, %v267, %v461
        %v1317 = vsel %vm1295, %v268, %v463
        %v1318 = vsel %vm1295, %v270, %v465
        %v1319 = vsel %vm1295, %v271, %v467
        %v1320 = vsel %vm1295, %v273, %v469
        %v1321 = vsel %vm1295, %v274, %v471
        %v1322 = vsel %vm1295, %v276, %v473
        %v1323 = vsel %vm1295, %v277, %v475
        %v1324 = vsel %vm1295, %v279, %v477
        %v1325 = vsel %vm1295, %v280, %v479
        %v1326 = vsel %vm1295, %v282, %v481
        %v1327 = vsel %vm1295, %v283, %v483
        %vm1328 = vcmask 64512
        %v1329 = vsel %vm1328, %v1296, %v598
        %v1330 = vsel %vm1328, %v1297, %v600
        %v1331 = vsel %vm1328, %v1298, %v602
        %v1332 = vsel %vm1328, %v1299, %v604
        %v1333 = vsel %vm1328, %v1300, %v606
        %v1334 = vsel %vm1328, %v1301, %v608
        %v1335 = vsel %vm1328, %v1302, %v610
        %v1336 = vsel %vm1328, %v1303, %v612
        %v1337 = vsel %vm1328, %v1304, %v614
        %v1338 = vsel %vm1328, %v1305, %v616
        %v1339 = vsel %vm1328, %v1306, %v618
        %v1340 = vsel %vm1328, %v1307, %v620
        %v1341 = vsel %vm1328, %v1308, %v622
        %v1342 = vsel %vm1328, %v1309, %v624
        %v1343 = vsel %vm1328, %v1310, %v626
        %v1344 = vsel %vm1328, %v1311, %v628
        %v1345 = vsel %vm1328, %v1312, %v630
        %v1346 = vsel %vm1328, %v1313, %v632
        %v1347 = vsel %vm1328, %v1314, %v634
        %v1348 = vsel %vm1328, %v1315, %v636
        %v1349 = vsel %vm1328, %v1316, %v638
        %v1350 = vsel %vm1328, %v1317, %v640
        %v1351 = vsel %vm1328, %v1318, %v642
        %v1352 = vsel %vm1328, %v1319, %v644
        %v1353 = vsel %vm1328, %v1320, %v646
        %v1354 = vsel %vm1328, %v1321, %v648
        %v1355 = vsel %vm1328, %v1322, %v650
        %v1356 = vsel %vm1328, %v1323, %v652
        %v1357 = vsel %vm1328, %v1324, %v654
        %v1358 = vsel %vm1328, %v1325, %v656
        %v1359 = vsel %vm1328, %v1326, %v658
        %v1360 = vsel %vm1328, %v1327, %v660
        %vm1361 = vcmask 97280
        %v1362 = vsel %vm1361, %v1329, %v696
        %v1363 = vsel %vm1361, %v1330, %v698
        %v1364 = vsel %vm1361, %v1331, %v700
        %v1365 = vsel %vm1361, %v1332, %v702
        %v1366 = vsel %vm1361, %v1333, %v704
        %v1367 = vsel %vm1361, %v1334, %v706
        %v1368 = vsel %vm1361, %v1335, %v708
        %v1369 = vsel %vm1361, %v1336, %v710
        %v1370 = vsel %vm1361, %v1337, %v712
        %v1371 = vsel %vm1361, %v1338, %v714
        %v1372 = vsel %vm1361, %v1339, %v716
        %v1373 = vsel %vm1361, %v1340, %v718
        %v1374 = vsel %vm1361, %v1341, %v720
        %v1375 = vsel %vm1361, %v1342, %v722
        %v1376 = vsel %vm1361, %v1343, %v724
        %v1377 = vsel %vm1361, %v1344, %v726
        %v1378 = vsel %vm1361, %v1345, %v728
        %v1379 = vsel %vm1361, %v1346, %v730
        %v1380 = vsel %vm1361, %v1347, %v732
        %v1381 = vsel %vm1361, %v1348, %v734
        %v1382 = vsel %vm1361, %v1349, %v736
        %v1383 = vsel %vm1361, %v1350, %v738
        %v1384 = vsel %vm1361, %v1351, %v740
        %v1385 = vsel %vm1361, %v1352, %v742
        %v1386 = vsel %vm1361, %v1353, %v744
        %v1387 = vsel %vm1361, %v1354, %v746
        %v1388 = vsel %vm1361, %v1355, %v748
        %v1389 = vsel %vm1361, %v1356, %v750
        %v1390 = vsel %vm1361, %v1357, %v752
        %v1391 = vsel %vm1361, %v1358, %v754
        %v1392 = vsel %vm1361, %v1359, %v756
        %v1393 = vsel %vm1361, %v1360, %v758
        %vm1394 = vcmask 130048
        %v1395 = vsel %vm1394, %v1362, %v798
        %v1396 = vsel %vm1394, %v1363, %v800
        %v1397 = vsel %vm1394, %v1364, %v802
        %v1398 = vsel %vm1394, %v1365, %v804
        %v1399 = vsel %vm1394, %v1366, %v806
        %v1400 = vsel %vm1394, %v1367, %v808
        %v1401 = vsel %vm1394, %v1368, %v810
        %v1402 = vsel %vm1394, %v1369, %v812
        %v1403 = vsel %vm1394, %v1370, %v814
        %v1404 = vsel %vm1394, %v1371, %v816
        %v1405 = vsel %vm1394, %v1372, %v818
        %v1406 = vsel %vm1394, %v1373, %v820
        %v1407 = vsel %vm1394, %v1374, %v822
        %v1408 = vsel %vm1394, %v1375, %v824
        %v1409 = vsel %vm1394, %v1376, %v826
        %v1410 = vsel %vm1394, %v1377, %v828
        %v1411 = vsel %vm1394, %v1378, %v830
        %v1412 = vsel %vm1394, %v1379, %v832
        %v1413 = vsel %vm1394, %v1380, %v834
        %v1414 = vsel %vm1394, %v1381, %v836
        %v1415 = vsel %vm1394, %v1382, %v838
        %v1416 = vsel %vm1394, %v1383, %v840
        %v1417 = vsel %vm1394, %v1384, %v842
        %v1418 = vsel %vm1394, %v1385, %v844
        %v1419 = vsel %vm1394, %v1386, %v846
        %v1420 = vsel %vm1394, %v1387, %v848
        %v1421 = vsel %vm1394, %v1388, %v850
        %v1422 = vsel %vm1394, %v1389, %v852
        %v1423 = vsel %vm1394, %v1390, %v854
        %v1424 = vsel %vm1394, %v1391, %v856
        %v1425 = vsel %vm1394, %v1392, %v858
        %v1426 = vsel %vm1394, %v1393, %v860
        %vm1427 = vcmask 162816
        %v1428 = vsel %vm1427, %v1395, %v899
        %v1429 = vsel %vm1427, %v1396, %v901
        %v1430 = vsel %vm1427, %v1397, %v903
        %v1431 = vsel %vm1427, %v1398, %v905
        %v1432 = vsel %vm1427, %v1399, %v907
        %v1433 = vsel %vm1427, %v1400, %v909
        %v1434 = vsel %vm1427, %v1401, %v911
        %v1435 = vsel %vm1427, %v1402, %v913
        %v1436 = vsel %vm1427, %v1403, %v915
        %v1437 = vsel %vm1427, %v1404, %v917
        %v1438 = vsel %vm1427, %v1405, %v919
        %v1439 = vsel %vm1427, %v1406, %v921
        %v1440 = vsel %vm1427, %v1407, %v923
        %v1441 = vsel %vm1427, %v1408, %v925
        %v1442 = vsel %vm1427, %v1409, %v927
        %v1443 = vsel %vm1427, %v1410, %v929
        %v1444 = vsel %vm1427, %v1411, %v931
        %v1445 = vsel %vm1427, %v1412, %v933
        %v1446 = vsel %vm1427, %v1413, %v935
        %v1447 = vsel %vm1427, %v1414, %v937
        %v1448 = vsel %vm1427, %v1415, %v939
        %v1449 = vsel %vm1427, %v1416, %v941
        %v1450 = vsel %vm1427, %v1417, %v943
        %v1451 = vsel %vm1427, %v1418, %v945
        %v1452 = vsel %vm1427, %v1419, %v947
        %v1453 = vsel %vm1427, %v1420, %v949
        %v1454 = vsel %vm1427, %v1421, %v951
        %v1455 = vsel %vm1427, %v1422, %v953
        %v1456 = vsel %vm1427, %v1423, %v955
        %v1457 = vsel %vm1427, %v1424, %v957
        %v1458 = vsel %vm1427, %v1425, %v959
        %v1459 = vsel %vm1427, %v1426, %v961
        %vm1460 = vcmask 195584
        %v1461 = vsel %vm1460, %v1428, %v997
        %v1462 = vsel %vm1460, %v1429, %v999
        %v1463 = vsel %vm1460, %v1430, %v1001
        %v1464 = vsel %vm1460, %v1431, %v1003
        %v1465 = vsel %vm1460, %v1432, %v1005
        %v1466 = vsel %vm1460, %v1433, %v1007
        %v1467 = vsel %vm1460, %v1434, %v1009
        %v1468 = vsel %vm1460, %v1435, %v1011
        %v1469 = vsel %vm1460, %v1436, %v1013
        %v1470 = vsel %vm1460, %v1437, %v1015
        %v1471 = vsel %vm1460, %v1438, %v1017
        %v1472 = vsel %vm1460, %v1439, %v1019
        %v1473 = vsel %vm1460, %v1440, %v1021
        %v1474 = vsel %vm1460, %v1441, %v1023
        %v1475 = vsel %vm1460, %v1442, %v1025
        %v1476 = vsel %vm1460, %v1443, %v1027
        %v1477 = vsel %vm1460, %v1444, %v1029
        %v1478 = vsel %vm1460, %v1445, %v1031
        %v1479 = vsel %vm1460, %v1446, %v1033
        %v1480 = vsel %vm1460, %v1447, %v1035
        %v1481 = vsel %vm1460, %v1448, %v1037
        %v1482 = vsel %vm1460, %v1449, %v1039
        %v1483 = vsel %vm1460, %v1450, %v1041
        %v1484 = vsel %vm1460, %v1451, %v1043
        %v1485 = vsel %vm1460, %v1452, %v1045
        %v1486 = vsel %vm1460, %v1453, %v1047
        %v1487 = vsel %vm1460, %v1454, %v1049
        %v1488 = vsel %vm1460, %v1455, %v1051
        %v1489 = vsel %vm1460, %v1456, %v1053
        %v1490 = vsel %vm1460, %v1457, %v1055
        %v1491 = vsel %vm1460, %v1458, %v1057
        %v1492 = vsel %vm1460, %v1459, %v1059
        %vm1493 = vcmask 228352
        %v1494 = vsel %vm1493, %v1461, %v1099
        %v1495 = vsel %vm1493, %v1462, %v1101
        %v1496 = vsel %vm1493, %v1463, %v1103
        %v1497 = vsel %vm1493, %v1464, %v1105
        %v1498 = vsel %vm1493, %v1465, %v1107
        %v1499 = vsel %vm1493, %v1466, %v1109
        %v1500 = vsel %vm1493, %v1467, %v1111
        %v1501 = vsel %vm1493, %v1468, %v1113
        %v1502 = vsel %vm1493, %v1469, %v1115
        %v1503 = vsel %vm1493, %v1470, %v1117
        %v1504 = vsel %vm1493, %v1471, %v1119
        %v1505 = vsel %vm1493, %v1472, %v1121
        %v1506 = vsel %vm1493, %v1473, %v1123
        %v1507 = vsel %vm1493, %v1474, %v1125
        %v1508 = vsel %vm1493, %v1475, %v1127
        %v1509 = vsel %vm1493, %v1476, %v1129
        %v1510 = vsel %vm1493, %v1477, %v1131
        %v1511 = vsel %vm1493, %v1478, %v1133
        %v1512 = vsel %vm1493, %v1479, %v1135
        %v1513 = vsel %vm1493, %v1480, %v1137
        %v1514 = vsel %vm1493, %v1481, %v1139
        %v1515 = vsel %vm1493, %v1482, %v1141
        %v1516 = vsel %vm1493, %v1483, %v1143
        %v1517 = vsel %vm1493, %v1484, %v1145
        %v1518 = vsel %vm1493, %v1485, %v1147
        %v1519 = vsel %vm1493, %v1486, %v1149
        %v1520 = vsel %vm1493, %v1487, %v1151
        %v1521 = vsel %vm1493, %v1488, %v1153
        %v1522 = vsel %vm1493, %v1489, %v1155
        %v1523 = vsel %vm1493, %v1490, %v1157
        %v1524 = vsel %vm1493, %v1491, %v1159
        %v1525 = vsel %vm1493, %v1492, %v1161
        %vm1526 = vcmask 261120
        %v1527 = vsel %vm1526, %v1494, %v1200
        %v1528 = vsel %vm1526, %v1495, %v1202
        %v1529 = vsel %vm1526, %v1496, %v1204
        %v1530 = vsel %vm1526, %v1497, %v1206
        %v1531 = vsel %vm1526, %v1498, %v1208
        %v1532 = vsel %vm1526, %v1499, %v1210
        %v1533 = vsel %vm1526, %v1500, %v1212
        %v1534 = vsel %vm1526, %v1501, %v1214
        %v1535 = vsel %vm1526, %v1502, %v1216
        %v1536 = vsel %vm1526, %v1503, %v1218
        %v1537 = vsel %vm1526, %v1504, %v1220
        %v1538 = vsel %vm1526, %v1505, %v1222
        %v1539 = vsel %vm1526, %v1506, %v1224
        %v1540 = vsel %vm1526, %v1507, %v1226
        %v1541 = vsel %vm1526, %v1508, %v1228
        %v1542 = vsel %vm1526, %v1509, %v1230
        %v1543 = vsel %vm1526, %v1510, %v1232
        %v1544 = vsel %vm1526, %v1511, %v1234
        %v1545 = vsel %vm1526, %v1512, %v1236
        %v1546 = vsel %vm1526, %v1513, %v1238
        %v1547 = vsel %vm1526, %v1514, %v1240
        %v1548 = vsel %vm1526, %v1515, %v1242
        %v1549 = vsel %vm1526, %v1516, %v1244
        %v1550 = vsel %vm1526, %v1517, %v1246
        %v1551 = vsel %vm1526, %v1518, %v1248
        %v1552 = vsel %vm1526, %v1519, %v1250
        %v1553 = vsel %vm1526, %v1520, %v1252
        %v1554 = vsel %vm1526, %v1521, %v1254
        %v1555 = vsel %vm1526, %v1522, %v1256
        %v1556 = vsel %vm1526, %v1523, %v1258
        %v1557 = vsel %vm1526, %v1524, %v1260
        %v1558 = vsel %vm1526, %v1525, %v1262
        %v1559 = vpack.c.bf16 %v1528, %v1527
        %v1560 = vpack.c.bf16 %v1530, %v1529
        %v1561 = vpack.c.bf16 %v1532, %v1531
        %v1562 = vpack.c.bf16 %v1534, %v1533
        %v1563 = vpack.c.bf16 %v1536, %v1535
        %v1564 = vpack.c.bf16 %v1538, %v1537
        %v1565 = vpack.c.bf16 %v1540, %v1539
        %v1566 = vpack.c.bf16 %v1542, %v1541
        %v1567 = vpack.c.bf16 %v1544, %v1543
        %v1568 = vpack.c.bf16 %v1546, %v1545
        %v1569 = vpack.c.bf16 %v1548, %v1547
        %v1570 = vpack.c.bf16 %v1550, %v1549
        %v1571 = vpack.c.bf16 %v1552, %v1551
        %v1572 = vpack.c.bf16 %v1554, %v1553
        %v1573 = vpack.c.bf16 %v1556, %v1555
        %v1574 = vpack.c.bf16 %v1558, %v1557
        %v1575 = vld [vmem:[%s1] sm:$0xf]
        %v1576 = vld [vmem:[%s1 + $0x4] sm:$0xf]
        %v1577 = vld [vmem:[%s1 + $0x8] sm:$0xf]
        %v1578 = vld [vmem:[%s1 + $0xc] sm:$0xf]
        %v1579 = vld [vmem:[%s1 + $0x10] sm:$0x3]
        %v1585 = vunpack.c.l.b16 %v1575
        %v1586 = vunpack.c.l.b16 %v1576
        %v1587 = vunpack.c.l.b16 %v1577
        %v1588 = vunpack.c.l.b16 %v1578
        %v1589 = vunpack.c.l.b16 %v1579
        %v1590 = vpack.c.b16 %v1586, %v1585
        %v1591 = vpack.c.b16 %v1588, %v1587
        %v1592 = vpack.c.b16 %v1589, %v1589
        %vm1595 = vcmask 293888
        %v1597 = vsel %vm1595, %v1559, 0
        %v1600 = vsel %vm1595, %v1560, 0
        %v1603 = vsel %vm1595, %v1561, 0
        %v1606 = vsel %vm1595, %v1562, 0
        %v1609 = vsel %vm1595, %v1563, 0
        %v1612 = vsel %vm1595, %v1564, 0
        %v1615 = vsel %vm1595, %v1565, 0
        %v1618 = vsel %vm1595, %v1566, 0
        %v1621 = vsel %vm1595, %v1567, 0
        %v1624 = vsel %vm1595, %v1568, 0
        %v1627 = vsel %vm1595, %v1569, 0
        %v1630 = vsel %vm1595, %v1570, 0
        %v1633 = vsel %vm1595, %v1571, 0
        %v1636 = vsel %vm1595, %v1572, 0
        %v1639 = vsel %vm1595, %v1573, 0
        %v1642 = vsel %vm1595, %v1574, 0
        %vm1644 = vcmask 1041408
        %v1646 = vsel %vm1644, %v1592, 0
        %1648 = vmatpush.bf16.msra.mxu0 0
        %1649 = vmatpush.bf16.msra.mxu0 0
        %1650 = vmatpush.bf16.msra.mxu0 0
        %1651 = vmatpush.bf16.msra.mxu0 0
        %1652 = vmatpush.bf16.msra.mxu0 0
        %1653 = vmatpush.bf16.msra.mxu0 %v1646
        %1654 = vmatpush.bf16.msra.mxu0 %v1591
        %1655 = vmatpush.bf16.msra.mxu0 %v1590
        %1656 = vmatmul.bf16.gmra.mxu0 %v1597
        %v1657 = vpop.f32.mrf.mxu0
        %v1658 = vadd.f32 0.0, %v1657
        %v1659 = vpop.f32.mrf.mxu0
        %v1660 = vadd.f32 0.0, %v1659
        %1661 = vmatmul.bf16.gmra.mxu0 %v1600
        %v1662 = vpop.f32.mrf.mxu0
        %v1663 = vadd.f32 0.0, %v1662
        %v1664 = vpop.f32.mrf.mxu0
        %v1665 = vadd.f32 0.0, %v1664
        %1666 = vmatmul.bf16.gmra.mxu0 %v1603
        %v1667 = vpop.f32.mrf.mxu0
        %v1668 = vadd.f32 0.0, %v1667
        %v1669 = vpop.f32.mrf.mxu0
        %v1670 = vadd.f32 0.0, %v1669
        %1671 = vmatmul.bf16.gmra.mxu0 %v1606
        %v1672 = vpop.f32.mrf.mxu0
        %v1673 = vadd.f32 0.0, %v1672
        %v1674 = vpop.f32.mrf.mxu0
        %v1675 = vadd.f32 0.0, %v1674
        %1676 = vmatmul.bf16.gmra.mxu0 %v1609
        %v1677 = vpop.f32.mrf.mxu0
        %v1678 = vadd.f32 0.0, %v1677
        %v1679 = vpop.f32.mrf.mxu0
        %v1680 = vadd.f32 0.0, %v1679
        %1681 = vmatmul.bf16.gmra.mxu0 %v1612
        %v1682 = vpop.f32.mrf.mxu0
        %v1683 = vadd.f32 0.0, %v1682
        %v1684 = vpop.f32.mrf.mxu0
        %v1685 = vadd.f32 0.0, %v1684
        %1686 = vmatmul.bf16.gmra.mxu0 %v1615
        %v1687 = vpop.f32.mrf.mxu0
        %v1688 = vadd.f32 0.0, %v1687
        %v1689 = vpop.f32.mrf.mxu0
        %v1690 = vadd.f32 0.0, %v1689
        %1691 = vmatmul.bf16.gmra.mxu0 %v1618
        %v1692 = vpop.f32.mrf.mxu0
        %v1693 = vadd.f32 0.0, %v1692
        %v1694 = vpop.f32.mrf.mxu0
        %v1695 = vadd.f32 0.0, %v1694
        %1696 = vmatmul.bf16.gmra.mxu0 %v1621
        %v1697 = vpop.f32.mrf.mxu0
        %v1698 = vadd.f32 0.0, %v1697
        %v1699 = vpop.f32.mrf.mxu0
        %v1700 = vadd.f32 0.0, %v1699
        %1701 = vmatmul.bf16.gmra.mxu0 %v1624
        %v1702 = vpop.f32.mrf.mxu0
        %v1703 = vadd.f32 0.0, %v1702
        %v1704 = vpop.f32.mrf.mxu0
        %v1705 = vadd.f32 0.0, %v1704
        %1706 = vmatmul.bf16.gmra.mxu0 %v1627
        %v1707 = vpop.f32.mrf.mxu0
        %v1708 = vadd.f32 0.0, %v1707
        %v1709 = vpop.f32.mrf.mxu0
        %v1710 = vadd.f32 0.0, %v1709
        %1711 = vmatmul.bf16.gmra.mxu0 %v1630
        %v1712 = vpop.f32.mrf.mxu0
        %v1713 = vadd.f32 0.0, %v1712
        %v1714 = vpop.f32.mrf.mxu0
        %v1715 = vadd.f32 0.0, %v1714
        %1716 = vmatmul.bf16.gmra.mxu0 %v1633
        %v1717 = vpop.f32.mrf.mxu0
        %v1718 = vadd.f32 0.0, %v1717
        %v1719 = vpop.f32.mrf.mxu0
        %v1720 = vadd.f32 0.0, %v1719
        %1721 = vmatmul.bf16.gmra.mxu0 %v1636
        %v1722 = vpop.f32.mrf.mxu0
        %v1723 = vadd.f32 0.0, %v1722
        %v1724 = vpop.f32.mrf.mxu0
        %v1725 = vadd.f32 0.0, %v1724
        %1726 = vmatmul.bf16.gmra.mxu0 %v1639
        %v1727 = vpop.f32.mrf.mxu0
        %v1728 = vadd.f32 0.0, %v1727
        %v1729 = vpop.f32.mrf.mxu0
        %v1730 = vadd.f32 0.0, %v1729
        %1731 = vmatmul.bf16.gmra.mxu0 %v1642
        %v1732 = vpop.f32.mrf.mxu0
        %v1733 = vadd.f32 0.0, %v1732
        %v1734 = vpop.f32.mrf.mxu0
        %v1735 = vadd.f32 0.0, %v1734
        %1736 = vdwg.mxu0
        %v1737 = vpack.c.bf16 %v1658, %v1658
        %v1738 = vpack.c.bf16 %v1660, %v1660
        %v1739 = vpack.c.bf16 %v1663, %v1663
        %v1740 = vpack.c.bf16 %v1665, %v1665
        %v1741 = vpack.c.bf16 %v1668, %v1668
        %v1742 = vpack.c.bf16 %v1670, %v1670
        %v1743 = vpack.c.bf16 %v1673, %v1673
        %v1744 = vpack.c.bf16 %v1675, %v1675
        %v1745 = vpack.c.bf16 %v1678, %v1678
        %v1746 = vpack.c.bf16 %v1680, %v1680
        %v1747 = vpack.c.bf16 %v1683, %v1683
        %v1748 = vpack.c.bf16 %v1685, %v1685
        %v1749 = vpack.c.bf16 %v1688, %v1688
        %v1750 = vpack.c.bf16 %v1690, %v1690
        %v1751 = vpack.c.bf16 %v1693, %v1693
        %v1752 = vpack.c.bf16 %v1695, %v1695
        %v1753 = vpack.c.bf16 %v1698, %v1698
        %v1754 = vpack.c.bf16 %v1700, %v1700
        %v1755 = vpack.c.bf16 %v1703, %v1703
        %v1756 = vpack.c.bf16 %v1705, %v1705
        %v1757 = vpack.c.bf16 %v1708, %v1708
        %v1758 = vpack.c.bf16 %v1710, %v1710
        %v1759 = vpack.c.bf16 %v1713, %v1713
        %v1760 = vpack.c.bf16 %v1715, %v1715
        %v1761 = vpack.c.bf16 %v1718, %v1718
        %v1762 = vpack.c.bf16 %v1720, %v1720
        %v1763 = vpack.c.bf16 %v1723, %v1723
        %v1764 = vpack.c.bf16 %v1725, %v1725
        %v1765 = vpack.c.bf16 %v1728, %v1728
        %v1766 = vpack.c.bf16 %v1730, %v1730
        %v1767 = vpack.c.bf16 %v1733, %v1733
        %v1768 = vpack.c.bf16 %v1735, %v1735
        %vm1769 = vcmask 125952
        %1770 = vst.msk [vmem:[%s181] sm:$0xf] %vm1769, %v1737
        %1771 = vst.msk [vmem:[%s181 + $0x4] sm:$0xf] %vm1769, %v1738
        %1772 = vst.msk [vmem:[%s181 + $0x8] sm:$0xf] %vm1769, %v1739
        %1773 = vst.msk [vmem:[%s181 + $0xc] sm:$0xf] %vm1769, %v1740
        %1774 = vst.msk [vmem:[%s181 + $0x10] sm:$0xf] %vm1769, %v1741
        %1775 = vst.msk [vmem:[%s181 + $0x14] sm:$0xf] %vm1769, %v1742
        %1776 = vst.msk [vmem:[%s181 + $0x18] sm:$0xf] %vm1769, %v1743
        %1777 = vst.msk [vmem:[%s181 + $0x1c] sm:$0xf] %vm1769, %v1744
        %1778 = vst.msk [vmem:[%s181 + $0x20] sm:$0xf] %vm1769, %v1745
        %1779 = vst.msk [vmem:[%s181 + $0x24] sm:$0xf] %vm1769, %v1746
        %1780 = vst.msk [vmem:[%s181 + $0x28] sm:$0xf] %vm1769, %v1747
        %1781 = vst.msk [vmem:[%s181 + $0x2c] sm:$0xf] %vm1769, %v1748
        %1782 = vst.msk [vmem:[%s181 + $0x30] sm:$0xf] %vm1769, %v1749
        %1783 = vst.msk [vmem:[%s181 + $0x34] sm:$0xf] %vm1769, %v1750
        %1784 = vst.msk [vmem:[%s181 + $0x38] sm:$0xf] %vm1769, %v1751
        %1785 = vst.msk [vmem:[%s181 + $0x3c] sm:$0xf] %vm1769, %v1752
        %1786 = vst.msk [vmem:[%s181 + $0x40] sm:$0xf] %vm1769, %v1753
        %1787 = vst.msk [vmem:[%s181 + $0x44] sm:$0xf] %vm1769, %v1754
        %1788 = vst.msk [vmem:[%s181 + $0x48] sm:$0xf] %vm1769, %v1755
        %1789 = vst.msk [vmem:[%s181 + $0x4c] sm:$0xf] %vm1769, %v1756
        %1790 = vst.msk [vmem:[%s181 + $0x50] sm:$0xf] %vm1769, %v1757
        %1791 = vst.msk [vmem:[%s181 + $0x54] sm:$0xf] %vm1769, %v1758
        %1792 = vst.msk [vmem:[%s181 + $0x58] sm:$0xf] %vm1769, %v1759
        %1793 = vst.msk [vmem:[%s181 + $0x5c] sm:$0xf] %vm1769, %v1760
        %1794 = vst.msk [vmem:[%s181 + $0x60] sm:$0xf] %vm1769, %v1761
        %1795 = vst.msk [vmem:[%s181 + $0x64] sm:$0xf] %vm1769, %v1762
        %1796 = vst.msk [vmem:[%s181 + $0x68] sm:$0xf] %vm1769, %v1763
        %1797 = vst.msk [vmem:[%s181 + $0x6c] sm:$0xf] %vm1769, %v1764
        %1798 = vst.msk [vmem:[%s181 + $0x70] sm:$0xf] %vm1769, %v1765
        %1799 = vst.msk [vmem:[%s181 + $0x74] sm:$0xf] %vm1769, %v1766
        %1800 = vst.msk [vmem:[%s181 + $0x78] sm:$0xf] %vm1769, %v1767
        %1801 = vst.msk [vmem:[%s181 + $0x7c] sm:$0xf] %vm1769, %v1768
        %v1802 = vsel %vm1394, %v1658, 0.0
        %v1803 = vsel %vm1394, %v1660, 0.0
        %v1804 = vadd.f32 %v1802, %v1803
        %v1805 = vsel %vm1394, %v1663, 0.0
        %v1806 = vadd.f32 %v1804, %v1805
        %v1807 = vsel %vm1394, %v1665, 0.0
        %v1808 = vadd.f32 %v1806, %v1807
        %v1809 = vsel %vm1394, %v1668, 0.0
        %v1810 = vadd.f32 %v1808, %v1809
        %v1811 = vsel %vm1394, %v1670, 0.0
        %v1812 = vadd.f32 %v1810, %v1811
        %v1813 = vsel %vm1394, %v1673, 0.0
        %v1814 = vadd.f32 %v1812, %v1813
        %v1815 = vsel %vm1394, %v1675, 0.0
        %v1816 = vadd.f32 %v1814, %v1815
        %v1817 = vsel %vm1394, %v1678, 0.0
        %v1818 = vadd.f32 %v1816, %v1817
        %v1819 = vsel %vm1394, %v1680, 0.0
        %v1820 = vadd.f32 %v1818, %v1819
        %v1821 = vsel %vm1394, %v1683, 0.0
        %v1822 = vadd.f32 %v1820, %v1821
        %v1823 = vsel %vm1394, %v1685, 0.0
        %v1824 = vadd.f32 %v1822, %v1823
        %v1825 = vsel %vm1394, %v1688, 0.0
        %v1826 = vadd.f32 %v1824, %v1825
        %v1827 = vsel %vm1394, %v1690, 0.0
        %v1828 = vadd.f32 %v1826, %v1827
        %v1829 = vsel %vm1394, %v1693, 0.0
        %v1830 = vadd.f32 %v1828, %v1829
        %v1831 = vsel %vm1394, %v1695, 0.0
        %v1832 = vadd.f32 %v1830, %v1831
        %v1833 = vsel %vm1394, %v1698, 0.0
        %v1834 = vadd.f32 %v1832, %v1833
        %v1835 = vsel %vm1394, %v1700, 0.0
        %v1836 = vadd.f32 %v1834, %v1835
        %v1837 = vsel %vm1394, %v1703, 0.0
        %v1838 = vadd.f32 %v1836, %v1837
        %v1839 = vsel %vm1394, %v1705, 0.0
        %v1840 = vadd.f32 %v1838, %v1839
        %v1841 = vsel %vm1394, %v1708, 0.0
        %v1842 = vadd.f32 %v1840, %v1841
        %v1843 = vsel %vm1394, %v1710, 0.0
        %v1844 = vadd.f32 %v1842, %v1843
        %v1845 = vsel %vm1394, %v1713, 0.0
        %v1846 = vadd.f32 %v1844, %v1845
        %v1847 = vsel %vm1394, %v1715, 0.0
        %v1848 = vadd.f32 %v1846, %v1847
        %v1849 = vsel %vm1394, %v1718, 0.0
        %v1850 = vadd.f32 %v1848, %v1849
        %v1851 = vsel %vm1394, %v1720, 0.0
        %v1852 = vadd.f32 %v1850, %v1851
        %v1853 = vsel %vm1394, %v1723, 0.0
        %v1854 = vadd.f32 %v1852, %v1853
        %v1855 = vsel %vm1394, %v1725, 0.0
        %v1856 = vadd.f32 %v1854, %v1855
        %v1857 = vsel %vm1394, %v1728, 0.0
        %v1858 = vadd.f32 %v1856, %v1857
        %v1859 = vsel %vm1394, %v1730, 0.0
        %v1860 = vadd.f32 %v1858, %v1859
        %v1861 = vsel %vm1394, %v1733, 0.0
        %v1862 = vadd.f32 %v1860, %v1861
        %v1863 = vsel %vm1394, %v1735, 0.0
        %v1864 = vadd.f32 %v1862, %v1863
        %v1865 = vrot.slane %v1864, 4
        %v1866 = vadd.f32 %v1864, %v1865
        %v1867 = vrot.slane %v1866, 2
        %v1868 = vadd.f32 %v1866, %v1867
        %v1869 = vrot.slane %v1868, 1
        %v1870 = vadd.f32 %v1868, %v1869
        %vm1871 = vcmask 122880
        %1872 = vst.msk [vmem:[%s171] sm:$0x1] %vm1871, %v1870
        %v1873 = vmul.f32 %v1658, %v1658
        %v1874 = vmul.f32 %v1660, %v1660
        %v1875 = vmul.f32 %v1663, %v1663
        %v1876 = vmul.f32 %v1665, %v1665
        %v1877 = vmul.f32 %v1668, %v1668
        %v1878 = vmul.f32 %v1670, %v1670
        %v1879 = vmul.f32 %v1673, %v1673
        %v1880 = vmul.f32 %v1675, %v1675
        %v1881 = vmul.f32 %v1678, %v1678
        %v1882 = vmul.f32 %v1680, %v1680
        %v1883 = vmul.f32 %v1683, %v1683
        %v1884 = vmul.f32 %v1685, %v1685
        %v1885 = vmul.f32 %v1688, %v1688
        %v1886 = vmul.f32 %v1690, %v1690
        %v1887 = vmul.f32 %v1693, %v1693
        %v1888 = vmul.f32 %v1695, %v1695
        %v1889 = vmul.f32 %v1698, %v1698
        %v1890 = vmul.f32 %v1700, %v1700
        %v1891 = vmul.f32 %v1703, %v1703
        %v1892 = vmul.f32 %v1705, %v1705
        %v1893 = vmul.f32 %v1708, %v1708
        %v1894 = vmul.f32 %v1710, %v1710
        %v1895 = vmul.f32 %v1713, %v1713
        %v1896 = vmul.f32 %v1715, %v1715
        %v1897 = vmul.f32 %v1718, %v1718
        %v1898 = vmul.f32 %v1720, %v1720
        %v1899 = vmul.f32 %v1723, %v1723
        %v1900 = vmul.f32 %v1725, %v1725
        %v1901 = vmul.f32 %v1728, %v1728
        %v1902 = vmul.f32 %v1730, %v1730
        %v1903 = vmul.f32 %v1733, %v1733
        %v1904 = vmul.f32 %v1735, %v1735
        %v1905 = vsel %vm1394, %v1873, 0.0
        %v1906 = vsel %vm1394, %v1874, 0.0
        %v1907 = vadd.f32 %v1905, %v1906
        %v1908 = vsel %vm1394, %v1875, 0.0
        %v1909 = vadd.f32 %v1907, %v1908
        %v1910 = vsel %vm1394, %v1876, 0.0
        %v1911 = vadd.f32 %v1909, %v1910
        %v1912 = vsel %vm1394, %v1877, 0.0
        %v1913 = vadd.f32 %v1911, %v1912
        %v1914 = vsel %vm1394, %v1878, 0.0
        %v1915 = vadd.f32 %v1913, %v1914
        %v1916 = vsel %vm1394, %v1879, 0.0
        %v1917 = vadd.f32 %v1915, %v1916
        %v1918 = vsel %vm1394, %v1880, 0.0
        %v1919 = vadd.f32 %v1917, %v1918
        %v1920 = vsel %vm1394, %v1881, 0.0
        %v1921 = vadd.f32 %v1919, %v1920
        %v1922 = vsel %vm1394, %v1882, 0.0
        %v1923 = vadd.f32 %v1921, %v1922
        %v1924 = vsel %vm1394, %v1883, 0.0
        %v1925 = vadd.f32 %v1923, %v1924
        %v1926 = vsel %vm1394, %v1884, 0.0
        %v1927 = vadd.f32 %v1925, %v1926
        %v1928 = vsel %vm1394, %v1885, 0.0
        %v1929 = vadd.f32 %v1927, %v1928
        %v1930 = vsel %vm1394, %v1886, 0.0
        %v1931 = vadd.f32 %v1929, %v1930
        %v1932 = vsel %vm1394, %v1887, 0.0
        %v1933 = vadd.f32 %v1931, %v1932
        %v1934 = vsel %vm1394, %v1888, 0.0
        %v1935 = vadd.f32 %v1933, %v1934
        %v1936 = vsel %vm1394, %v1889, 0.0
        %v1937 = vadd.f32 %v1935, %v1936
        %v1938 = vsel %vm1394, %v1890, 0.0
        %v1939 = vadd.f32 %v1937, %v1938
        %v1940 = vsel %vm1394, %v1891, 0.0
        %v1941 = vadd.f32 %v1939, %v1940
        %v1942 = vsel %vm1394, %v1892, 0.0
        %v1943 = vadd.f32 %v1941, %v1942
        %v1944 = vsel %vm1394, %v1893, 0.0
        %v1945 = vadd.f32 %v1943, %v1944
        %v1946 = vsel %vm1394, %v1894, 0.0
        %v1947 = vadd.f32 %v1945, %v1946
        %v1948 = vsel %vm1394, %v1895, 0.0
        %v1949 = vadd.f32 %v1947, %v1948
        %v1950 = vsel %vm1394, %v1896, 0.0
        %v1951 = vadd.f32 %v1949, %v1950
        %v1952 = vsel %vm1394, %v1897, 0.0
        %v1953 = vadd.f32 %v1951, %v1952
        %v1954 = vsel %vm1394, %v1898, 0.0
        %v1955 = vadd.f32 %v1953, %v1954
        %v1956 = vsel %vm1394, %v1899, 0.0
        %v1957 = vadd.f32 %v1955, %v1956
        %v1958 = vsel %vm1394, %v1900, 0.0
        %v1959 = vadd.f32 %v1957, %v1958
        %v1960 = vsel %vm1394, %v1901, 0.0
        %v1961 = vadd.f32 %v1959, %v1960
        %v1962 = vsel %vm1394, %v1902, 0.0
        %v1963 = vadd.f32 %v1961, %v1962
        %v1964 = vsel %vm1394, %v1903, 0.0
        %v1965 = vadd.f32 %v1963, %v1964
        %v1966 = vsel %vm1394, %v1904, 0.0
        %v1967 = vadd.f32 %v1965, %v1966
        %v1968 = vrot.slane %v1967, 4
        %v1969 = vadd.f32 %v1967, %v1968
        %v1970 = vrot.slane %v1969, 2
        %v1971 = vadd.f32 %v1969, %v1970
        %v1972 = vrot.slane %v1971, 1
        %v1973 = vadd.f32 %v1971, %v1972
        %1974 = vst.msk [vmem:[%s171 + $0x1] sm:$0x1] %vm1871, %v1973
        %p1975 = scmp.lt.s32.totalorder %s18, 1
        %s1976 = scalar_select %p1975, %s18, 1
        %s1977 = smul.addr %s1976, 32
        %s1978 = smul.addr %s1977, 4
        %s1979 = scalar_lea.vmem %s2, %s1978
        %s1980 = sand.u32 %s99, 1
        %s1981 = scalar_lea.sflag [#allocation3], %s1980
        %s1982 = sand.u32 %s99, 1
        %s1983 = smul.addr %s1982, 2
        %s1984 = scalar_lea.vmem [#allocation2], %s1983
        // Predicated region
        $region29: #{tpu_custom_call.1} parent=27 // pred_check
          %p1985 = pneg %p83
        $region30: #{tpu_custom_call.1} parent=27 // pred_check_branch
          %1987 = sbr.rel (%p1985) target = $region32
        $region31: #{tpu_custom_call.1} parent=27 // pred_region
          _
        $region32: #{tpu_custom_call.1} parent=27 // pred_fallthru
          _
        // Predicated region
        $region33: #{tpu_custom_call.1} parent=27 // pred_check
          %p1988 = pneg %p109
        $region34: #{tpu_custom_call.1} parent=27 // pred_check_branch
          %1990 = sbr.rel (%p1988) target = $region36
        $region35: #{tpu_custom_call.1} parent=27 // pred_region
          %1992 = vsyncadd %s1981, 0
          %s1993 = smul.addr %s18, 2
          %s1994 = scalar_lea.hbm %s3, %s1993
          %s1996 = sshll.u32 %s1984, 4
          %s1997 = int_to_ptr.vmem [resolvable:$true] %s1996
          %s1998 = sshll.u32 %s1994, 4
          %s1999 = int_to_ptr.hbm [resolvable:$true] %s1998
          %2001 = dma.vmem_to_hbm [thread:$0]  %s1997, 32, %s1999, %s1981
        $region36: #{tpu_custom_call.1} parent=27 // pred_fallthru
          _
      $region28: #{tpu_custom_call.1} parent=5 // pred_fallthru
        _
      %p2002 = scmp.le.s32.totalorder 2, %s13
      // Predicated region
      $region37: #{tpu_custom_call.1} parent=5 // pred_check
        %p2003 = pneg %p2002
      $region38: #{tpu_custom_call.1} parent=5 // pred_check_branch
        %2005 = sbr.rel (%p2003) target = $region40
      $region39: #{tpu_custom_call.1} parent=5 // pred_region
        %s2006 = ssub.s32 %s13, 2
        // Predicated region
        $region41: #{tpu_custom_call.1} parent=39 // pred_check
          %p2007 = pneg %p89
        $region42: #{tpu_custom_call.1} parent=39 // pred_check_branch
          %2009 = sbr.rel (%p2007) target = $region44
        $region43: #{tpu_custom_call.1} parent=39 // pred_region
          %p2010 = scmp.lt.s32.totalorder %s19, 1
          %s2011 = scalar_select %p2010, %s19, 1
          %s2012 = smul.addr %s2011, 32
          %s2013 = smul.addr %s2012, 4
          %s2014 = scalar_lea.vmem %s2, %s2013
        $region44: #{tpu_custom_call.1} parent=39 // pred_fallthru
          _
        // Predicated region
        $region45: #{tpu_custom_call.1} parent=39 // pred_check
          %p2015 = pneg %p115
        $region46: #{tpu_custom_call.1} parent=39 // pred_check_branch
          %2017 = sbr.rel (%p2015) target = $region48
        $region47: #{tpu_custom_call.1} parent=39 // pred_region
          %s2018 = sand.u32 %s100, 1
          %s2019 = scalar_lea.sflag [#allocation3], %s2018
          %s2020 = sand.u32 %s100, 1
          %s2021 = smul.addr %s2020, 2
          %s2022 = scalar_lea.vmem [#allocation2], %s2021
          %2024 = dma.done %s2019, 32
        $region48: #{tpu_custom_call.1} parent=39 // pred_fallthru
          _
      $region40: #{tpu_custom_call.1} parent=5 // pred_fallthru
        _
    $region6: #{tpu_custom_call.1} parent=1 // loop_footer
      %s17 = sadd.s32 1, %s13
    $region7: #{tpu_custom_call.1} parent=1 // loop_footer_branch
      %12 = sbr.rel target = $region3
    $region8: #{tpu_custom_call.1} parent=1 // loop_exit
      _
    %2025 = vsyncpa [#allocation3], 1
    %s2026 = scalar_lea.sflag [#allocation3], 1
    %2027 = vsyncpa %s2026, 1

</llo_original>
